<compile_context>
chip_gen: v7x
topology: tpu7x:2x2x1
jax: 0.10.0
libtpu: 0.0.40
codegen_flags: <defaults>
</compile_context>

<pallas_src>
import functools
import math

import jax
import jax.numpy as jnp
from jax.experimental import pallas as pl
from jax.experimental.pallas import tpu as pltpu

# ---- problem sizes (small, consistent with the module) ----
D_MODEL = 32
N_HEAD = 4
MLP_RATIO = 4.0
MLP_WIDTH = int(D_MODEL * MLP_RATIO)   # 128
SEQ = 8
BATCH = 2
EPS = 1e-5                             # torch.nn.LayerNorm default
LANES = 128


def _layernorm(x, g, b):
    mean = jnp.mean(x, axis=-1, keepdims=True)
    var = jnp.mean(jnp.square(x - mean), axis=-1, keepdims=True)
    return (x - mean) * jax.lax.rsqrt(var + EPS) * g + b


def _gelu_tanh(x):
    # tanh-approx GELU: transcendental goes to the otherwise-idle EUP slot.
    c = math.sqrt(2.0 / math.pi)
    return 0.5 * x * (1.0 + jnp.tanh(c * (x + 0.044715 * x * x * x)))


def _gelu_exact(x):
    # exact (erf-based) GELU, matching torch.nn.GELU() default; reference only.
    return 0.5 * x * (1.0 + jax.lax.erf(x * (1.0 / math.sqrt(2.0))))


def residual_attention_block_kernel(
    x_ref,      # (1, L, D) f32   one sequence per grid step (n-major layout)
    vec_ref,    # (8, 128)  f32   packed vectors, see kernel_params()
    wattn_ref,  # (D, 4D)   bf16  [in_proj W^T (q pre-scaled) | out_proj W^T]
    wfc_ref,    # (D, M)    bf16  mlp.c_fc W^T
    wproj_ref,  # (M, D)    bf16  mlp.c_proj W^T
    o_ref,      # (1, L, D)
    *,
    n_head,
):
    _, seq_len, d = x_ref.shape
    hd = d // n_head

    x = x_ref[0]                        # (L, D) f32

    vec = vec_ref[...]                  # (8, 128) f32
    g1, b1 = vec[0:1, :d], vec[1:2, :d]
    g2, b2 = vec[2:3, :d], vec[3:4, :d]
    bo, bproj = vec[4:5, :d], vec[5:6, :d]
    bqkv_row = vec[6:7, :]              # qkv bias in lanes [0, 3D), zeros after
    bfc_row = vec[7:8, :]               # c_fc bias (M = 128 lanes)

    w_attn = wattn_ref[...]             # (D, 4D) bf16

    # ---------------- attention branch ----------------
    h1 = _layernorm(x, g1, b1)
    # One lane-dense (D x 4D) matmul.  The last D output columns (h1 @ out_proj^T)
    # are unused filler - the MXU slot is idle, and this avoids lane-slicing the
    # weight slab before the matmul.  1/sqrt(hd) is already folded into q weights.
    y = jnp.dot(h1.astype(jnp.bfloat16), w_attn,
                preferred_element_type=jnp.float32) + bqkv_row      # (L, 4D) f32
    q = y[:, 0 * d:1 * d]
    k = y[:, 1 * d:2 * d]
    v = y[:, 2 * d:3 * d]

    # Per-head (L, L) score tiles via dot_general (contract last dims: no k.T),
    # stacked along sublanes so mask-free softmax runs once over (H*L, L).
    nt_dims = (((1,), (1,)), ((), ()))
    s_all = jnp.concatenate(
        [jax.lax.dot_general(q[:, h * hd:(h + 1) * hd],
                             k[:, h * hd:(h + 1) * hd],
                             nt_dims, preferred_element_type=jnp.float32)
         for h in range(n_head)], axis=0)                           # (H*L, L)
    s_all = s_all - jnp.max(s_all, axis=-1, keepdims=True)
    p_all = jnp.exp(s_all)
    p_all = p_all * pl.reciprocal(jnp.sum(p_all, axis=-1, keepdims=True),
                                  approx=True)

    # P.V per head, accumulated straight into the out-projection (no lane concat).
    attn_acc = x + bo                   # residual + out_proj bias seed the acc
    for h in range(n_head):
        o_h = jnp.dot(p_all[h * seq_len:(h + 1) * seq_len, :],
                      v[:, h * hd:(h + 1) * hd],
                      preferred_element_type=jnp.float32)           # (L, hd)
        wo_h = w_attn[h * hd:(h + 1) * hd, 3 * d:4 * d]             # (hd, D) bf16
        attn_acc = attn_acc + jnp.dot(o_h.astype(jnp.bfloat16), wo_h,
                                      preferred_element_type=jnp.float32)

    # ---------------- MLP branch ----------------
    h2 = _layernorm(attn_acc, g2, b2)
    m = jnp.dot(h2.astype(jnp.bfloat16), wfc_ref[...],
                preferred_element_type=jnp.float32) + bfc_row       # (L, M)
    m = _gelu_tanh(m)
    m = jnp.dot(m.astype(jnp.bfloat16), wproj_ref[...],
                preferred_element_type=jnp.float32) + bproj         # (L, D)

    o_ref[0] = (attn_acc + m).astype(o_ref.dtype)


def residual_attention_block(x_lnd, kparams):
    """x_lnd: (L, N, D) float32 (PyTorch nn.MultiheadAttention default layout)."""
    L, N, D = x_lnd.shape
    vec8, w_attn, wfc, wproj = kparams

    # n-major layout: one grid step per sequence.  Tiny (2 KB) wrapper transpose;
    # it removes the same-sequence mask and, with a "parallel" grid axis, lets
    # v7x's two TensorCores each own one sequence.
    x_nld = jnp.transpose(x_lnd, (1, 0, 2))

    kernel = functools.partial(residual_attention_block_kernel, n_head=N_HEAD)

    out = pl.pallas_call(
        kernel,
        out_shape=jax.ShapeDtypeStruct((N, L, D), x_lnd.dtype),
        grid=(N,),
        in_specs=[
            pl.BlockSpec((1, L, D), lambda n: (n, 0, 0)),
            pl.BlockSpec(vec8.shape, lambda n: (0, 0)),
            pl.BlockSpec(w_attn.shape, lambda n: (0, 0)),
            pl.BlockSpec(wfc.shape, lambda n: (0, 0)),
            pl.BlockSpec(wproj.shape, lambda n: (0, 0)),
        ],
        out_specs=pl.BlockSpec((1, L, D), lambda n: (n, 0, 0)),
        compiler_params=pltpu.CompilerParams(
            dimension_semantics=("parallel",)),
    )(x_nld, vec8, w_attn, wfc, wproj)

    return jnp.transpose(out, (1, 0, 2))


def init_params(key, d=D_MODEL, m=MLP_WIDTH):
    """Deterministic synthetic parameters in PyTorch shapes."""
    ks = jax.random.split(key, 8)
    std = 0.02
    return dict(
        ln1_g=jnp.ones((d,), jnp.float32), ln1_b=jnp.zeros((d,), jnp.float32),
        in_proj_w=std * jax.random.normal(ks[0], (3 * d, d), jnp.float32),
        in_proj_b=std * jax.random.normal(ks[1], (3 * d,), jnp.float32),
        out_proj_w=std * jax.random.normal(ks[2], (d, d), jnp.float32),
        out_proj_b=std * jax.random.normal(ks[3], (d,), jnp.float32),
        ln2_g=jnp.ones((d,), jnp.float32), ln2_b=jnp.zeros((d,), jnp.float32),
        fc_w=std * jax.random.normal(ks[4], (m, d), jnp.float32),
        fc_b=std * jax.random.normal(ks[5], (m,), jnp.float32),
        proj_w=std * jax.random.normal(ks[6], (d, m), jnp.float32),
        proj_b=std * jax.random.normal(ks[7], (d,), jnp.float32),
    )


def kernel_params(p):
    """Kernel-facing operands.

    * 1/sqrt(head_dim) folded into the q rows of in_proj W / b (host-side,
      one-time weight transform).
    * All eight small vectors packed into one (8, 128) f32 slab.
    * [in_proj W^T | out_proj W^T] concatenated into one lane-dense bf16 slab.
    * MLP weights transposed and stored bf16.
    """
    d = p["ln1_g"].shape[0]
    m = p["fc_b"].shape[0]
    assert 3 * d <= LANES and m <= LANES and d % N_HEAD == 0
    scale = 1.0 / math.sqrt(d // N_HEAD)

    in_w = jnp.concatenate([p["in_proj_w"][:d] * scale, p["in_proj_w"][d:]], axis=0)
    in_b = jnp.concatenate([p["in_proj_b"][:d] * scale, p["in_proj_b"][d:]], axis=0)

    def pad_row(v):
        return jnp.pad(v, (0, LANES - v.shape[0])).reshape(1, LANES)

    vec8 = jnp.concatenate(
        [pad_row(p["ln1_g"]), pad_row(p["ln1_b"]),
         pad_row(p["ln2_g"]), pad_row(p["ln2_b"]),
         pad_row(p["out_proj_b"]), pad_row(p["proj_b"]),
         pad_row(in_b), pad_row(p["fc_b"])], axis=0).astype(jnp.float32)  # (8, 128)

    w_attn = jnp.concatenate([in_w.T, p["out_proj_w"].T],
                             axis=1).astype(jnp.bfloat16)                 # (D, 4D)
    wfc = p["fc_w"].T.astype(jnp.bfloat16)                                # (D, M)
    wproj = p["proj_w"].T.astype(jnp.bfloat16)                            # (M, D)
    return (vec8, w_attn, wfc, wproj)


def reference_block(x_lnd, p):
    """Pure-JAX reference of the same math (PyTorch semantics), HIGHEST precision."""
    L, N, D = x_lnd.shape
    hd = D // N_HEAD
    scale = 1.0 / math.sqrt(hd)
    hi = jax.lax.Precision.HIGHEST

    def per_batch(x):  # x: (L, D)
        h1 = _layernorm(x, p["ln1_g"], p["ln1_b"])
        qkv = jnp.dot(h1, p["in_proj_w"].T, precision=hi) + p["in_proj_b"]
        q, k, v = qkv[:, :D], qkv[:, D:2 * D], qkv[:, 2 * D:]
        outs = []
        for h in range(N_HEAD):
            sl = slice(h * hd, (h + 1) * hd)
            s = jnp.dot(q[:, sl] * scale, k[:, sl].T, precision=hi)
            pr = jax.nn.softmax(s, axis=-1)
            outs.append(jnp.dot(pr, v[:, sl], precision=hi))
        attn = jnp.dot(jnp.concatenate(outs, -1), p["out_proj_w"].T,
                       precision=hi) + p["out_proj_b"]
        x = x + attn
        h2 = _layernorm(x, p["ln2_g"], p["ln2_b"])
        mm = jnp.dot(h2, p["fc_w"].T, precision=hi) + p["fc_b"]
        mm = _gelu_exact(mm)
        mm = jnp.dot(mm, p["proj_w"].T, precision=hi) + p["proj_b"]
        return x + mm

    xb = jnp.transpose(x_lnd, (1, 0, 2))          # (N, L, D)
    yb = jax.vmap(per_batch)(xb)
    return jnp.transpose(yb, (1, 0, 2))


if __name__ == "__main__":
    key = jax.random.PRNGKey(0)
    kx, kp = jax.random.split(key)
    x = jax.random.normal(kx, (SEQ, BATCH, D_MODEL), jnp.float32)  # (L, N, D)
    torch_params = init_params(kp)
    kparams = kernel_params(torch_params)

    y = residual_attention_block(x, kparams)
    y = jax.block_until_ready(y)

    y_ref = reference_block(x, torch_params)
    assert y.shape == (SEQ, BATCH, D_MODEL)
    # Tolerance 1e-2 accepted explicitly: bf16 weights / bf16 MXU pass,
    # tanh-approx GELU, and EUP approximate reciprocal in softmax.
    err = float(jnp.max(jnp.abs(y - y_ref)))
    assert jnp.allclose(y, y_ref, atol=1e-2, rtol=1e-2), err

    print("KERNEL_OK")
</pallas_src>

<mosaic_0001>
module attributes {stable_mosaic.version = 11 : i64} {
  func.func @residual_attention_block_kernel(%arg0: i32, %arg1: memref<1x8x32xf32, #tpu.memory_space<vmem>>, %arg2: memref<8x128xf32, #tpu.memory_space<vmem>>, %arg3: memref<32x128xbf16, #tpu.memory_space<vmem>>, %arg4: memref<32x128xbf16, #tpu.memory_space<vmem>>, %arg5: memref<128x32xbf16, #tpu.memory_space<vmem>>, %arg6: memref<1x8x32xf32, #tpu.memory_space<vmem>>) attributes {dimension_semantics = [#tpu.dimension_semantics<parallel>], iteration_bounds = array<i64: 2>, scalar_prefetch = 0 : i64, scratch_operands = 0 : i64, tpu.core_type = #tpu.core_type<tc>, window_params = [{transform_indices = @transform_0, window_bounds = array<i64: 1, 8, 32>}, {pipeline_mode = #tpu.pipeline_mode<synchronous>, transform_indices = @transform_1, window_bounds = array<i64: 8, 128>}, {pipeline_mode = #tpu.pipeline_mode<synchronous>, transform_indices = @transform_2, window_bounds = array<i64: 32, 128>}, {pipeline_mode = #tpu.pipeline_mode<synchronous>, transform_indices = @transform_3, window_bounds = array<i64: 32, 128>}, {pipeline_mode = #tpu.pipeline_mode<synchronous>, transform_indices = @transform_4, window_bounds = array<i64: 128, 32>}, {transform_indices = @transform_5, window_bounds = array<i64: 1, 8, 32>}]} {
    %c0 = arith.constant 0 : index
    %c0_0 = arith.constant 0 : index
    %c0_1 = arith.constant 0 : index
    %0 = vector.load %arg1[%c0, %c0_0, %c0_1] : memref<1x8x32xf32, #tpu.memory_space<vmem>>, vector<1x8x32xf32>
    %1 = vector.shape_cast %0 : vector<1x8x32xf32> to vector<8x32xf32>
    %c0_2 = arith.constant 0 : index
    %c0_3 = arith.constant 0 : index
    %2 = vector.load %arg2[%c0_2, %c0_3] : memref<8x128xf32, #tpu.memory_space<vmem>>, vector<8x128xf32>
    %3 = vector.extract_strided_slice %2 {offsets = [0, 0], sizes = [1, 32], strides = [1, 1]} : vector<8x128xf32> to vector<1x32xf32>
    %4 = vector.extract_strided_slice %2 {offsets = [1, 0], sizes = [1, 32], strides = [1, 1]} : vector<8x128xf32> to vector<1x32xf32>
    %5 = vector.extract_strided_slice %2 {offsets = [2, 0], sizes = [1, 32], strides = [1, 1]} : vector<8x128xf32> to vector<1x32xf32>
    %6 = vector.extract_strided_slice %2 {offsets = [3, 0], sizes = [1, 32], strides = [1, 1]} : vector<8x128xf32> to vector<1x32xf32>
    %7 = vector.extract_strided_slice %2 {offsets = [4, 0], sizes = [1, 32], strides = [1, 1]} : vector<8x128xf32> to vector<1x32xf32>
    %8 = vector.extract_strided_slice %2 {offsets = [5, 0], sizes = [1, 32], strides = [1, 1]} : vector<8x128xf32> to vector<1x32xf32>
    %9 = vector.extract_strided_slice %2 {offsets = [6, 0], sizes = [1, 128], strides = [1, 1]} : vector<8x128xf32> to vector<1x128xf32>
    %10 = vector.extract_strided_slice %2 {offsets = [7, 0], sizes = [1, 128], strides = [1, 1]} : vector<8x128xf32> to vector<1x128xf32>
    %c0_4 = arith.constant 0 : index
    %c0_5 = arith.constant 0 : index
    %11 = vector.load %arg3[%c0_4, %c0_5] : memref<32x128xbf16, #tpu.memory_space<vmem>>, vector<32x128xbf16>
    %cst = arith.constant dense<0.000000e+00> : vector<8xf32>
    %12 = vector.multi_reduction <add>, %1, %cst [1] : vector<8x32xf32> to vector<8xf32>
    %13 = vector.shape_cast %12 : vector<8xf32> to vector<8x1xf32>
    %cst_6 = arith.constant 3.200000e+01 : f32
    %14 = vector.broadcast %cst_6 : f32 to vector<8x1xf32>
    %15 = arith.divf %13, %14 : vector<8x1xf32>
    %16 = vector.broadcast %15 : vector<8x1xf32> to vector<8x32xf32>
    %17 = arith.subf %1, %16 : vector<8x32xf32>
    %18 = arith.mulf %17, %17 : vector<8x32xf32>
    %cst_7 = arith.constant dense<0.000000e+00> : vector<8xf32>
    %19 = vector.multi_reduction <add>, %18, %cst_7 [1] : vector<8x32xf32> to vector<8xf32>
    %20 = vector.shape_cast %19 : vector<8xf32> to vector<8x1xf32>
    %cst_8 = arith.constant 3.200000e+01 : f32
    %21 = vector.broadcast %cst_8 : f32 to vector<8x1xf32>
    %22 = arith.divf %20, %21 : vector<8x1xf32>
    %23 = vector.broadcast %15 : vector<8x1xf32> to vector<8x32xf32>
    %24 = arith.subf %1, %23 : vector<8x32xf32>
    %cst_9 = arith.constant 9.99999974E-6 : f32
    %25 = vector.broadcast %cst_9 : f32 to vector<8x1xf32>
    %26 = arith.addf %22, %25 : vector<8x1xf32>
    %27 = math.rsqrt %26 : vector<8x1xf32>
    %28 = vector.broadcast %27 : vector<8x1xf32> to vector<8x32xf32>
    %29 = arith.mulf %24, %28 : vector<8x32xf32>
    %30 = vector.broadcast %3 : vector<1x32xf32> to vector<8x32xf32>
    %31 = arith.mulf %29, %30 : vector<8x32xf32>
    %32 = vector.broadcast %4 : vector<1x32xf32> to vector<8x32xf32>
    %33 = arith.addf %31, %32 : vector<8x32xf32>
    %34 = arith.truncf %33 : vector<8x32xf32> to vector<8x32xbf16>
    %cst_10 = arith.constant dense<0.000000e+00> : vector<8x128xf32>
    %35 = tpu.matmul %34, %11, %cst_10 {dimension_numbers = #tpu.dot_dimension_numbers<[1], [0], [0], [1], [0, 0, 1, 1], [], []>} : vector<8x32xbf16>, vector<32x128xbf16>, vector<8x128xf32> -> vector<8x128xf32>
    %36 = vector.broadcast %9 : vector<1x128xf32> to vector<8x128xf32>
    %37 = arith.addf %35, %36 : vector<8x128xf32>
    %38 = vector.extract_strided_slice %37 {offsets = [0, 0], sizes = [8, 32], strides = [1, 1]} : vector<8x128xf32> to vector<8x32xf32>
    %39 = vector.extract_strided_slice %37 {offsets = [0, 32], sizes = [8, 32], strides = [1, 1]} : vector<8x128xf32> to vector<8x32xf32>
    %40 = vector.extract_strided_slice %37 {offsets = [0, 64], sizes = [8, 32], strides = [1, 1]} : vector<8x128xf32> to vector<8x32xf32>
    %41 = vector.extract_strided_slice %38 {offsets = [0, 0], sizes = [8, 8], strides = [1, 1]} : vector<8x32xf32> to vector<8x8xf32>
    %42 = vector.extract_strided_slice %39 {offsets = [0, 0], sizes = [8, 8], strides = [1, 1]} : vector<8x32xf32> to vector<8x8xf32>
    %cst_11 = arith.constant dense<0.000000e+00> : vector<8x8xf32>
    %43 = tpu.matmul %41, %42, %cst_11 {dimension_numbers = #tpu.dot_dimension_numbers<[1], [1], [0], [0], [0, 0, 1, 0], [], []>} : vector<8x8xf32>, vector<8x8xf32>, vector<8x8xf32> -> vector<8x8xf32>
    %44 = vector.extract_strided_slice %38 {offsets = [0, 8], sizes = [8, 8], strides = [1, 1]} : vector<8x32xf32> to vector<8x8xf32>
    %45 = vector.extract_strided_slice %39 {offsets = [0, 8], sizes = [8, 8], strides = [1, 1]} : vector<8x32xf32> to vector<8x8xf32>
    %cst_12 = arith.constant dense<0.000000e+00> : vector<8x8xf32>
    %46 = tpu.matmul %44, %45, %cst_12 {dimension_numbers = #tpu.dot_dimension_numbers<[1], [1], [0], [0], [0, 0, 1, 0], [], []>} : vector<8x8xf32>, vector<8x8xf32>, vector<8x8xf32> -> vector<8x8xf32>
    %47 = vector.extract_strided_slice %38 {offsets = [0, 16], sizes = [8, 8], strides = [1, 1]} : vector<8x32xf32> to vector<8x8xf32>
    %48 = vector.extract_strided_slice %39 {offsets = [0, 16], sizes = [8, 8], strides = [1, 1]} : vector<8x32xf32> to vector<8x8xf32>
    %cst_13 = arith.constant dense<0.000000e+00> : vector<8x8xf32>
    %49 = tpu.matmul %47, %48, %cst_13 {dimension_numbers = #tpu.dot_dimension_numbers<[1], [1], [0], [0], [0, 0, 1, 0], [], []>} : vector<8x8xf32>, vector<8x8xf32>, vector<8x8xf32> -> vector<8x8xf32>
    %50 = vector.extract_strided_slice %38 {offsets = [0, 24], sizes = [8, 8], strides = [1, 1]} : vector<8x32xf32> to vector<8x8xf32>
    %51 = vector.extract_strided_slice %39 {offsets = [0, 24], sizes = [8, 8], strides = [1, 1]} : vector<8x32xf32> to vector<8x8xf32>
    %cst_14 = arith.constant dense<0.000000e+00> : vector<8x8xf32>
    %52 = tpu.matmul %50, %51, %cst_14 {dimension_numbers = #tpu.dot_dimension_numbers<[1], [1], [0], [0], [0, 0, 1, 0], [], []>} : vector<8x8xf32>, vector<8x8xf32>, vector<8x8xf32> -> vector<8x8xf32>
    %53 = tpu.concatenate %43, %46, %49, %52 in 0 : vector<8x8xf32>, vector<8x8xf32>, vector<8x8xf32>, vector<8x8xf32> -> vector<32x8xf32>
    %cst_15 = arith.constant dense<0xFF800000> : vector<32xf32>
    %54 = vector.multi_reduction <maximumf>, %53, %cst_15 [1] : vector<32x8xf32> to vector<32xf32>
    %55 = vector.shape_cast %54 : vector<32xf32> to vector<32x1xf32>
    %56 = vector.broadcast %55 : vector<32x1xf32> to vector<32x8xf32>
    %57 = arith.subf %53, %56 : vector<32x8xf32>
    %58 = math.exp %57 : vector<32x8xf32>
    %cst_16 = arith.constant dense<0.000000e+00> : vector<32xf32>
    %59 = vector.multi_reduction <add>, %58, %cst_16 [1] : vector<32x8xf32> to vector<32xf32>
    %60 = vector.shape_cast %59 : vector<32xf32> to vector<32x1xf32>
    %61 = tpu.reciprocal %60 {approx = true} : vector<32x1xf32> -> vector<32x1xf32>
    %62 = vector.broadcast %61 : vector<32x1xf32> to vector<32x8xf32>
    %63 = arith.mulf %58, %62 : vector<32x8xf32>
    %64 = vector.broadcast %7 : vector<1x32xf32> to vector<8x32xf32>
    %65 = arith.addf %1, %64 : vector<8x32xf32>
    %66 = vector.extract_strided_slice %63 {offsets = [0, 0], sizes = [8, 8], strides = [1, 1]} : vector<32x8xf32> to vector<8x8xf32>
    %67 = vector.extract_strided_slice %40 {offsets = [0, 0], sizes = [8, 8], strides = [1, 1]} : vector<8x32xf32> to vector<8x8xf32>
    %cst_17 = arith.constant dense<0.000000e+00> : vector<8x8xf32>
    %68 = tpu.matmul %66, %67, %cst_17 {dimension_numbers = #tpu.dot_dimension_numbers<[1], [0], [0], [1], [0, 0, 1, 1], [], []>} : vector<8x8xf32>, vector<8x8xf32>, vector<8x8xf32> -> vector<8x8xf32>
    %69 = vector.extract_strided_slice %11 {offsets = [0, 96], sizes = [8, 32], strides = [1, 1]} : vector<32x128xbf16> to vector<8x32xbf16>
    %70 = arith.truncf %68 : vector<8x8xf32> to vector<8x8xbf16>
    %cst_18 = arith.constant dense<0.000000e+00> : vector<8x32xf32>
    %71 = tpu.matmul %70, %69, %cst_18 {dimension_numbers = #tpu.dot_dimension_numbers<[1], [0], [0], [1], [0, 0, 1, 1], [], []>} : vector<8x8xbf16>, vector<8x32xbf16>, vector<8x32xf32> -> vector<8x32xf32>
    %72 = arith.addf %65, %71 : vector<8x32xf32>
    %73 = vector.extract_strided_slice %63 {offsets = [8, 0], sizes = [8, 8], strides = [1, 1]} : vector<32x8xf32> to vector<8x8xf32>
    %74 = vector.extract_strided_slice %40 {offsets = [0, 8], sizes = [8, 8], strides = [1, 1]} : vector<8x32xf32> to vector<8x8xf32>
    %cst_19 = arith.constant dense<0.000000e+00> : vector<8x8xf32>
    %75 = tpu.matmul %73, %74, %cst_19 {dimension_numbers = #tpu.dot_dimension_numbers<[1], [0], [0], [1], [0, 0, 1, 1], [], []>} : vector<8x8xf32>, vector<8x8xf32>, vector<8x8xf32> -> vector<8x8xf32>
    %76 = vector.extract_strided_slice %11 {offsets = [8, 96], sizes = [8, 32], strides = [1, 1]} : vector<32x128xbf16> to vector<8x32xbf16>
    %77 = arith.truncf %75 : vector<8x8xf32> to vector<8x8xbf16>
    %cst_20 = arith.constant dense<0.000000e+00> : vector<8x32xf32>
    %78 = tpu.matmul %77, %76, %cst_20 {dimension_numbers = #tpu.dot_dimension_numbers<[1], [0], [0], [1], [0, 0, 1, 1], [], []>} : vector<8x8xbf16>, vector<8x32xbf16>, vector<8x32xf32> -> vector<8x32xf32>
    %79 = arith.addf %72, %78 : vector<8x32xf32>
    %80 = vector.extract_strided_slice %63 {offsets = [16, 0], sizes = [8, 8], strides = [1, 1]} : vector<32x8xf32> to vector<8x8xf32>
    %81 = vector.extract_strided_slice %40 {offsets = [0, 16], sizes = [8, 8], strides = [1, 1]} : vector<8x32xf32> to vector<8x8xf32>
    %cst_21 = arith.constant dense<0.000000e+00> : vector<8x8xf32>
    %82 = tpu.matmul %80, %81, %cst_21 {dimension_numbers = #tpu.dot_dimension_numbers<[1], [0], [0], [1], [0, 0, 1, 1], [], []>} : vector<8x8xf32>, vector<8x8xf32>, vector<8x8xf32> -> vector<8x8xf32>
    %83 = vector.extract_strided_slice %11 {offsets = [16, 96], sizes = [8, 32], strides = [1, 1]} : vector<32x128xbf16> to vector<8x32xbf16>
    %84 = arith.truncf %82 : vector<8x8xf32> to vector<8x8xbf16>
    %cst_22 = arith.constant dense<0.000000e+00> : vector<8x32xf32>
    %85 = tpu.matmul %84, %83, %cst_22 {dimension_numbers = #tpu.dot_dimension_numbers<[1], [0], [0], [1], [0, 0, 1, 1], [], []>} : vector<8x8xbf16>, vector<8x32xbf16>, vector<8x32xf32> -> vector<8x32xf32>
    %86 = arith.addf %79, %85 : vector<8x32xf32>
    %87 = vector.extract_strided_slice %63 {offsets = [24, 0], sizes = [8, 8], strides = [1, 1]} : vector<32x8xf32> to vector<8x8xf32>
    %88 = vector.extract_strided_slice %40 {offsets = [0, 24], sizes = [8, 8], strides = [1, 1]} : vector<8x32xf32> to vector<8x8xf32>
    %cst_23 = arith.constant dense<0.000000e+00> : vector<8x8xf32>
    %89 = tpu.matmul %87, %88, %cst_23 {dimension_numbers = #tpu.dot_dimension_numbers<[1], [0], [0], [1], [0, 0, 1, 1], [], []>} : vector<8x8xf32>, vector<8x8xf32>, vector<8x8xf32> -> vector<8x8xf32>
    %90 = vector.extract_strided_slice %11 {offsets = [24, 96], sizes = [8, 32], strides = [1, 1]} : vector<32x128xbf16> to vector<8x32xbf16>
    %91 = arith.truncf %89 : vector<8x8xf32> to vector<8x8xbf16>
    %cst_24 = arith.constant dense<0.000000e+00> : vector<8x32xf32>
    %92 = tpu.matmul %91, %90, %cst_24 {dimension_numbers = #tpu.dot_dimension_numbers<[1], [0], [0], [1], [0, 0, 1, 1], [], []>} : vector<8x8xbf16>, vector<8x32xbf16>, vector<8x32xf32> -> vector<8x32xf32>
    %93 = arith.addf %86, %92 : vector<8x32xf32>
    %cst_25 = arith.constant dense<0.000000e+00> : vector<8xf32>
    %94 = vector.multi_reduction <add>, %93, %cst_25 [1] : vector<8x32xf32> to vector<8xf32>
    %95 = vector.shape_cast %94 : vector<8xf32> to vector<8x1xf32>
    %cst_26 = arith.constant 3.200000e+01 : f32
    %96 = vector.broadcast %cst_26 : f32 to vector<8x1xf32>
    %97 = arith.divf %95, %96 : vector<8x1xf32>
    %98 = vector.broadcast %97 : vector<8x1xf32> to vector<8x32xf32>
    %99 = arith.subf %93, %98 : vector<8x32xf32>
    %100 = arith.mulf %99, %99 : vector<8x32xf32>
    %cst_27 = arith.constant dense<0.000000e+00> : vector<8xf32>
    %101 = vector.multi_reduction <add>, %100, %cst_27 [1] : vector<8x32xf32> to vector<8xf32>
    %102 = vector.shape_cast %101 : vector<8xf32> to vector<8x1xf32>
    %cst_28 = arith.constant 3.200000e+01 : f32
    %103 = vector.broadcast %cst_28 : f32 to vector<8x1xf32>
    %104 = arith.divf %102, %103 : vector<8x1xf32>
    %105 = vector.broadcast %97 : vector<8x1xf32> to vector<8x32xf32>
    %106 = arith.subf %93, %105 : vector<8x32xf32>
    %cst_29 = arith.constant 9.99999974E-6 : f32
    %107 = vector.broadcast %cst_29 : f32 to vector<8x1xf32>
    %108 = arith.addf %104, %107 : vector<8x1xf32>
    %109 = math.rsqrt %108 : vector<8x1xf32>
    %110 = vector.broadcast %109 : vector<8x1xf32> to vector<8x32xf32>
    %111 = arith.mulf %106, %110 : vector<8x32xf32>
    %112 = vector.broadcast %5 : vector<1x32xf32> to vector<8x32xf32>
    %113 = arith.mulf %111, %112 : vector<8x32xf32>
    %114 = vector.broadcast %6 : vector<1x32xf32> to vector<8x32xf32>
    %115 = arith.addf %113, %114 : vector<8x32xf32>
    %116 = arith.truncf %115 : vector<8x32xf32> to vector<8x32xbf16>
    %c0_30 = arith.constant 0 : index
    %c0_31 = arith.constant 0 : index
    %117 = vector.load %arg4[%c0_30, %c0_31] : memref<32x128xbf16, #tpu.memory_space<vmem>>, vector<32x128xbf16>
    %cst_32 = arith.constant dense<0.000000e+00> : vector<8x128xf32>
    %118 = tpu.matmul %116, %117, %cst_32 {dimension_numbers = #tpu.dot_dimension_numbers<[1], [0], [0], [1], [0, 0, 1, 1], [], []>} : vector<8x32xbf16>, vector<32x128xbf16>, vector<8x128xf32> -> vector<8x128xf32>
    %119 = vector.broadcast %10 : vector<1x128xf32> to vector<8x128xf32>
    %120 = arith.addf %118, %119 : vector<8x128xf32>
    %cst_33 = arith.constant 5.000000e-01 : f32
    %121 = vector.broadcast %cst_33 : f32 to vector<8x128xf32>
    %122 = arith.mulf %121, %120 : vector<8x128xf32>
    %cst_34 = arith.constant 4.471500e-02 : f32
    %123 = vector.broadcast %cst_34 : f32 to vector<8x128xf32>
    %124 = arith.mulf %123, %120 : vector<8x128xf32>
    %125 = arith.mulf %124, %120 : vector<8x128xf32>
    %126 = arith.mulf %125, %120 : vector<8x128xf32>
    %127 = arith.addf %120, %126 : vector<8x128xf32>
    %cst_35 = arith.constant 0.797884583 : f32
    %128 = vector.broadcast %cst_35 : f32 to vector<8x128xf32>
    %129 = arith.mulf %128, %127 : vector<8x128xf32>
    %130 = math.tanh %129 : vector<8x128xf32>
    %cst_36 = arith.constant 1.000000e+00 : f32
    %131 = vector.broadcast %cst_36 : f32 to vector<8x128xf32>
    %132 = arith.addf %131, %130 : vector<8x128xf32>
    %133 = arith.mulf %122, %132 : vector<8x128xf32>
    %134 = arith.truncf %133 : vector<8x128xf32> to vector<8x128xbf16>
    %c0_37 = arith.constant 0 : index
    %c0_38 = arith.constant 0 : index
    %135 = vector.load %arg5[%c0_37, %c0_38] : memref<128x32xbf16, #tpu.memory_space<vmem>>, vector<128x32xbf16>
    %cst_39 = arith.constant dense<0.000000e+00> : vector<8x32xf32>
    %136 = tpu.matmul %134, %135, %cst_39 {dimension_numbers = #tpu.dot_dimension_numbers<[1], [0], [0], [1], [0, 0, 1, 1], [], []>} : vector<8x128xbf16>, vector<128x32xbf16>, vector<8x32xf32> -> vector<8x32xf32>
    %137 = vector.broadcast %8 : vector<1x32xf32> to vector<8x32xf32>
    %138 = arith.addf %136, %137 : vector<8x32xf32>
    %139 = arith.addf %93, %138 : vector<8x32xf32>
    %c0_40 = arith.constant 0 : index
    %c0_41 = arith.constant 0 : index
    %c0_42 = arith.constant 0 : index
    %140 = vector.load %arg6[%c0_40, %c0_41, %c0_42] : memref<1x8x32xf32, #tpu.memory_space<vmem>>, vector<1x8x32xf32>
    %141 = vector.shape_cast %140 : vector<1x8x32xf32> to vector<8x32xf32>
    %142 = vector.shape_cast %139 : vector<8x32xf32> to vector<1x8x32xf32>
    tpu.vector_store %arg6[%c0_40, %c0_41, %c0_42], %142 {strides = array<i32>} : memref<1x8x32xf32, #tpu.memory_space<vmem>>, vector<1x8x32xf32>,
    return
  }
  func.func @transform_0(%arg0: i32) -> (i32, i32, i32) {
    %c0_i32 = arith.constant 0 : i32
    %c0_i32_0 = arith.constant 0 : i32
    %c0_i32_1 = arith.constant 0 : i32
    return %arg0, %c0_i32, %c0_i32_0 : i32, i32, i32
  }
  func.func @transform_1(%arg0: i32) -> (i32, i32) {
    %c0_i32 = arith.constant 0 : i32
    %c0_i32_0 = arith.constant 0 : i32
    %c0_i32_1 = arith.constant 0 : i32
    return %c0_i32, %c0_i32_0 : i32, i32
  }
  func.func @transform_2(%arg0: i32) -> (i32, i32) {
    %c0_i32 = arith.constant 0 : i32
    %c0_i32_0 = arith.constant 0 : i32
    %c0_i32_1 = arith.constant 0 : i32
    return %c0_i32, %c0_i32_0 : i32, i32
  }
  func.func @transform_3(%arg0: i32) -> (i32, i32) {
    %c0_i32 = arith.constant 0 : i32
    %c0_i32_0 = arith.constant 0 : i32
    %c0_i32_1 = arith.constant 0 : i32
    return %c0_i32, %c0_i32_0 : i32, i32
  }
  func.func @transform_4(%arg0: i32) -> (i32, i32) {
    %c0_i32 = arith.constant 0 : i32
    %c0_i32_0 = arith.constant 0 : i32
    %c0_i32_1 = arith.constant 0 : i32
    return %c0_i32, %c0_i32_0 : i32, i32
  }
  func.func @transform_5(%arg0: i32) -> (i32, i32, i32) {
    %c0_i32 = arith.constant 0 : i32
    %c0_i32_0 = arith.constant 0 : i32
    %c0_i32_1 = arith.constant 0 : i32
    return %arg0, %c0_i32, %c0_i32_0 : i32, i32, i32
  }
}

</mosaic_0001>

<llo_original>
// kernel: tpu_custom_call.1
$region0: #{tpu_custom_call.1}
  #allocation0 [shape = 'u32[]', space=smem, size = 0x4, offset = 0x4, fixed_abs, tag = 'smem constant byte address 0x4 - core index']
  #allocation1 [shape = 'u32[144,128]{1,0:T(1,128)}', space=vmem, size = 0x12000, scoped, tag = 'internal scratch']
  %s0 = inlined_call_operand.vmem [shape: f32[2,8,32], index: 0, kind: input, shape index: {}]
  %s1 = inlined_call_operand.vmem [shape: f32[8,128], index: 1, kind: input, shape index: {}]
  %s2 = inlined_call_operand.vmem [shape: bf16[32,128], index: 2, kind: input, shape index: {}]
  %s3 = inlined_call_operand.vmem [shape: bf16[32,128], index: 3, kind: input, shape index: {}]
  %s4 = inlined_call_operand.vmem [shape: bf16[128,32], index: 4, kind: input, shape index: {}]
  %s5 = inlined_call_operand.hbm [shape: f32[2,8,32], index: 5, kind: output, shape index: {}]
  %s6 = sld [smem:[#allocation0]]
  $region53: #{tpu_custom_call.1} parent=0
    _
  %s8 = ssub.s32 1, %s6
  %s9 = scalar_select 0, %s8, %s6
  $region1: #{tpu_custom_call.1} parent=0
    #allocation2 [shape = 'u8[8192]{0}', space=vmem, size = 0x2000, scoped, tag = 'output window, operand 0']
    #allocation3 [shape = 's32[2]{0}', space=sflag, size = 0x8, scoped, tag = 'scoped memory for tpu_custom_call.1']
    %10 = vsyncpa [#allocation3], 0
    %s11 = scalar_lea.sflag [#allocation3], 1
    %12 = vsyncpa %s11, 0
    loop: start=0, step=1, limit=4
    $region2: #{tpu_custom_call.1} parent=1 // loop_pre_header
      _
    $region3: #{tpu_custom_call.1} parent=1 // loop_header
      %s14 = sphi 0, %s18
      %p15 = scmp.ge.s32.totalorder %s14, 4
      %s24 = sphi 0, %s26
      %s27 = sphi 0, %s24
      %s28 = sphi 0, %s27
      %s44 = sphi 0, %s28
      %s48 = sphi 0, %s48
      %s50 = sphi 0, %s48
      %s51 = sphi 0, %s50
      %s65 = sphi 0, %s51
      %s69 = sphi 0, %s69
      %s71 = sphi 0, %s69
      %s72 = sphi 0, %s71
      %s86 = sphi 0, %s72
      %s90 = sphi 0, %s90
      %s92 = sphi 0, %s90
      %s93 = sphi 0, %s92
      %s107 = sphi 0, %s93
      %s111 = sphi 0, %s111
      %s113 = sphi 0, %s111
      %s114 = sphi 0, %s113
      %s128 = sphi 0, %s114
      %s134 = sphi 0, %s136
      %s137 = sphi 0, %s134
      %s138 = sphi 0, %s137
      %s154 = sphi 0, %s138
    $region4: #{tpu_custom_call.1} parent=1 // loop_header_branch
      %17 = sbr.rel (%p15) target = $region8
    $region5: #{tpu_custom_call.1} parent=1 // loop_body
      %s19 = ssub.s32 %s14, 1
      %s20 = ssub.s32 %s14, 2
      %s21 = sadd.s32 %s14, 1
      %s22 = ssub.s32 %s14, %s21
      %p23 = scmp.eq.s32.totalorder %s22, 0
      %s25 = sadd.s32 %s24, 1
      %s26 = scalar_select %p23, %s24, %s25
      %p29 = pneg %p23
      %p30 = scmp.eq.s32.totalorder %s14, 1
      %p31 = por %p29, %p30
      %p32 = scmp.ne.s32.totalorder %s24, %s27
      %p33 = scmp.eq.s32.totalorder %s14, 0
      %p34 = por %p32, %p33
      %p35 = scmp.ne.s32.totalorder %s24, %s27
      %p36 = scmp.eq.s32.totalorder %s19, 1
      %p37 = por %p35, %p36
      %p38 = scmp.ne.s32.totalorder %s27, %s28
      %p39 = scmp.eq.s32.totalorder %s19, 0
      %p40 = por %p38, %p39
      %p41 = scmp.ne.s32.totalorder %s27, %s28
      %p42 = scmp.eq.s32.totalorder %s20, 1
      %p43 = por %p41, %p42
      %p45 = scmp.ne.s32.totalorder %s28, %s44
      %p46 = scmp.eq.s32.totalorder %s20, 0
      %p47 = por %p45, %p46
      %s49 = sadd.s32 %s48, 1
      %p52 = scmp.eq.s32.totalorder %s14, 1
      %p53 = scmp.ne.s32.totalorder %s48, %s50
      %p54 = scmp.eq.s32.totalorder %s14, 0
      %p55 = por %p53, %p54
      %p56 = scmp.ne.s32.totalorder %s48, %s50
      %p57 = scmp.eq.s32.totalorder %s19, 1
      %p58 = por %p56, %p57
      %p59 = scmp.ne.s32.totalorder %s50, %s51
      %p60 = scmp.eq.s32.totalorder %s19, 0
      %p61 = por %p59, %p60
      %p62 = scmp.ne.s32.totalorder %s50, %s51
      %p63 = scmp.eq.s32.totalorder %s20, 1
      %p64 = por %p62, %p63
      %p66 = scmp.ne.s32.totalorder %s51, %s65
      %p67 = scmp.eq.s32.totalorder %s20, 0
      %p68 = por %p66, %p67
      %s70 = sadd.s32 %s69, 1
      %p73 = scmp.eq.s32.totalorder %s14, 1
      %p74 = scmp.ne.s32.totalorder %s69, %s71
      %p75 = scmp.eq.s32.totalorder %s14, 0
      %p76 = por %p74, %p75
      %p77 = scmp.ne.s32.totalorder %s69, %s71
      %p78 = scmp.eq.s32.totalorder %s19, 1
      %p79 = por %p77, %p78
      %p80 = scmp.ne.s32.totalorder %s71, %s72
      %p81 = scmp.eq.s32.totalorder %s19, 0
      %p82 = por %p80, %p81
      %p83 = scmp.ne.s32.totalorder %s71, %s72
      %p84 = scmp.eq.s32.totalorder %s20, 1
      %p85 = por %p83, %p84
      %p87 = scmp.ne.s32.totalorder %s72, %s86
      %p88 = scmp.eq.s32.totalorder %s20, 0
      %p89 = por %p87, %p88
      %s91 = sadd.s32 %s90, 1
      %p94 = scmp.eq.s32.totalorder %s14, 1
      %p95 = scmp.ne.s32.totalorder %s90, %s92
      %p96 = scmp.eq.s32.totalorder %s14, 0
      %p97 = por %p95, %p96
      %p98 = scmp.ne.s32.totalorder %s90, %s92
      %p99 = scmp.eq.s32.totalorder %s19, 1
      %p100 = por %p98, %p99
      %p101 = scmp.ne.s32.totalorder %s92, %s93
      %p102 = scmp.eq.s32.totalorder %s19, 0
      %p103 = por %p101, %p102
      %p104 = scmp.ne.s32.totalorder %s92, %s93
      %p105 = scmp.eq.s32.totalorder %s20, 1
      %p106 = por %p104, %p105
      %p108 = scmp.ne.s32.totalorder %s93, %s107
      %p109 = scmp.eq.s32.totalorder %s20, 0
      %p110 = por %p108, %p109
      %s112 = sadd.s32 %s111, 1
      %p115 = scmp.eq.s32.totalorder %s14, 1
      %p116 = scmp.ne.s32.totalorder %s111, %s113
      %p117 = scmp.eq.s32.totalorder %s14, 0
      %p118 = por %p116, %p117
      %p119 = scmp.ne.s32.totalorder %s111, %s113
      %p120 = scmp.eq.s32.totalorder %s19, 1
      %p121 = por %p119, %p120
      %p122 = scmp.ne.s32.totalorder %s113, %s114
      %p123 = scmp.eq.s32.totalorder %s19, 0
      %p124 = por %p122, %p123
      %p125 = scmp.ne.s32.totalorder %s113, %s114
      %p126 = scmp.eq.s32.totalorder %s20, 1
      %p127 = por %p125, %p126
      %p129 = scmp.ne.s32.totalorder %s114, %s128
      %p130 = scmp.eq.s32.totalorder %s20, 0
      %p131 = por %p129, %p130
      %s132 = ssub.s32 %s14, %s21
      %p133 = scmp.eq.s32.totalorder %s132, 0
      %s135 = sadd.s32 %s134, 1
      %s136 = scalar_select %p133, %s134, %s135
      %p139 = pneg %p133
      %p140 = scmp.eq.s32.totalorder %s14, 1
      %p141 = por %p139, %p140
      %p142 = scmp.ne.s32.totalorder %s134, %s137
      %p143 = scmp.eq.s32.totalorder %s14, 0
      %p144 = por %p142, %p143
      %p145 = scmp.ne.s32.totalorder %s134, %s137
      %p146 = scmp.eq.s32.totalorder %s19, 1
      %p147 = por %p145, %p146
      %p148 = scmp.ne.s32.totalorder %s137, %s138
      %p149 = scmp.eq.s32.totalorder %s19, 0
      %p150 = por %p148, %p149
      %p151 = scmp.ne.s32.totalorder %s137, %s138
      %p152 = scmp.eq.s32.totalorder %s20, 1
      %p153 = por %p151, %p152
      %p155 = scmp.ne.s32.totalorder %s138, %s154
      %p156 = scmp.eq.s32.totalorder %s20, 0
      %p157 = por %p155, %p156
      %p158 = scmp.le.s32.totalorder 1, %s14
      %p159 = scmp.lt.s32.totalorder %s14, 3
      %p160 = pnand %p158, %p159
      %p161 = pneg %p160
      // Predicated region
      $region9: #{tpu_custom_call.1} parent=5 // pred_check
        _
      $region10: #{tpu_custom_call.1} parent=5 // pred_check_branch
        %163 = sbr.rel (%p160) target = $region12
      $region11: #{tpu_custom_call.1} parent=5 // pred_region
        %s164 = ssub.s32 %s14, 1
        // Predicated region
        $region13: #{tpu_custom_call.1} parent=11 // pred_check
          %p165 = pneg %p61
        $region14: #{tpu_custom_call.1} parent=11 // pred_check_branch
          %167 = sbr.rel (%p165) target = $region16
        $region15: #{tpu_custom_call.1} parent=11 // pred_region
          _
        $region16: #{tpu_custom_call.1} parent=11 // pred_fallthru
          _
        // Predicated region
        $region17: #{tpu_custom_call.1} parent=11 // pred_check
          %p168 = pneg %p82
        $region18: #{tpu_custom_call.1} parent=11 // pred_check_branch
          %170 = sbr.rel (%p168) target = $region20
        $region19: #{tpu_custom_call.1} parent=11 // pred_region
          _
        $region20: #{tpu_custom_call.1} parent=11 // pred_fallthru
          _
        // Predicated region
        $region21: #{tpu_custom_call.1} parent=11 // pred_check
          %p171 = pneg %p103
        $region22: #{tpu_custom_call.1} parent=11 // pred_check_branch
          %173 = sbr.rel (%p171) target = $region24
        $region23: #{tpu_custom_call.1} parent=11 // pred_region
          _
        $region24: #{tpu_custom_call.1} parent=11 // pred_fallthru
          _
        // Predicated region
        $region25: #{tpu_custom_call.1} parent=11 // pred_check
          %p174 = pneg %p124
        $region26: #{tpu_custom_call.1} parent=11 // pred_check_branch
          %176 = sbr.rel (%p174) target = $region28
        $region27: #{tpu_custom_call.1} parent=11 // pred_region
          _
        $region28: #{tpu_custom_call.1} parent=11 // pred_fallthru
          _
      $region12: #{tpu_custom_call.1} parent=5 // pred_fallthru
        _
      %p177 = scmp.lt.s32.totalorder %s14, 2
      // Predicated region
      $region29: #{tpu_custom_call.1} parent=5 // pred_check
        %p178 = pneg %p177
      $region30: #{tpu_custom_call.1} parent=5 // pred_check_branch
        %180 = sbr.rel (%p178) target = $region32
      $region31: #{tpu_custom_call.1} parent=5 // pred_region
        // Predicated region
        $region33: #{tpu_custom_call.1} parent=31 // pred_check
          %p181 = pneg %p34
        $region34: #{tpu_custom_call.1} parent=31 // pred_check_branch
          %183 = sbr.rel (%p181) target = $region36
        $region35: #{tpu_custom_call.1} parent=31 // pred_region
          %p184 = scmp.lt.s32.totalorder %s14, 1
          %s185 = scalar_select %p184, %s14, 1
          %s186 = smul.addr %s185, 8
          %s187 = scalar_lea.vmem %s0, %s186
        $region36: #{tpu_custom_call.1} parent=31 // pred_fallthru
          _
      $region32: #{tpu_custom_call.1} parent=5 // pred_fallthru
        _
      %p188 = scmp.le.s32.totalorder 1, %s14
      %p189 = scmp.lt.s32.totalorder %s14, 3
      %p190 = pnand %p188, %p189
      %p191 = pneg %p190
      // Predicated region
      $region37: #{tpu_custom_call.1} parent=5 // pred_check
        _
      $region38: #{tpu_custom_call.1} parent=5 // pred_check_branch
        %193 = sbr.rel (%p190) target = $region40
      $region39: #{tpu_custom_call.1} parent=5 // pred_region
        %s194 = ssub.s32 %s14, 1
        %p195 = scmp.lt.s32.totalorder %s19, 1
        %s196 = scalar_select %p195, %s19, 1
        %s197 = smul.addr %s196, 8
        %s198 = scalar_lea.vmem %s0, %s197
        %p199 = pneg %p40
        %p200 = pneg %p37
        %p201 = pneg %p61
        %p202 = pneg %p58
        %p203 = pneg %p82
        %p204 = pneg %p79
        %p205 = pneg %p103
        %p206 = pneg %p100
        %p207 = pneg %p124
        %p208 = pneg %p121
        %p209 = pneg %p150
        %p210 = pneg %p147
        %s211 = sand.u32 %s137, 1
        %s212 = scalar_lea.sflag [#allocation3], %s211
        %s213 = sand.u32 %s137, 1
        %s214 = smul.addr %s213, 8
        %s215 = scalar_lea.vmem [#allocation2], %s214
        %p216 = scmp.lt.s32.totalorder %s19, 1
        %s217 = scalar_select %p216, %s19, 1
        %s218 = smul.addr %s217, 8
        %s219 = scalar_lea.vmem %s0, %s218
        %v221 = vld [vmem:[%s219] sm:$0xff]
        %v222 = vld [vmem:[%s1] sm:$0xff]
        %v223 = vld [vmem:[%s2] sm:$0xf]
        %v224 = vld [vmem:[%s2 + $0x4] sm:$0xf]
        %v225 = vld [vmem:[%s2 + $0x8] sm:$0xf]
        %v226 = vld [vmem:[%s2 + $0xc] sm:$0xf]
        %vm227 = vcmask 261120
        %v228 = vsel %vm227, %v221, 0.0
        %229 = vadd.xlane.f32.xlu0 %v228
        %v230 = vpop.xlane.xlu0 %229
        %v231 = vrcp.pop 32.0
        %v232 = vmul.f32 %v230, %v231
        %v233 = vsub.f32 %v221, %v232
        %v234 = vmul.f32 %v233, %v233
        %v235 = vsel %vm227, %v234, 0.0
        %236 = vadd.xlane.f32.xlu0 %v235
        %v237 = vpop.xlane.xlu0 %236
        %v238 = vmul.f32 %v237, %v231
        %v239 = vadd.f32 %v238, 1e-05
        %v240 = vrsqrt.pop %v239
        %v241 = vmul.f32 %v233, %v240
        %v242 = vlaneseq
        %v243 = vshrl.u32 %v242, 7
        %v244 = vsub.s32 0, %v243
        %v245 = vrot.slane %v222, %v244
        %v246 = vmul.f32 %v241, %v245
        %v247 = vlaneseq
        %v248 = vshrl.u32 %v247, 7
        %v249 = vsub.s32 1, %v248
        %v250 = vrot.slane %v222, %v249
        %v251 = vadd.f32 %v246, %v250
        %v252 = vpack.c.bf16 %v251, %v251
        %v253 = vlaneseq
        %v254 = vshrl.u32 %v253, 7
        %v255 = vsub.s32 6, %v254
        %v256 = vrot.slane %v222, %v255
        %v261 = vunpack.c.l.b16 %v223
        %v262 = vunpack.c.l.b16 %v224
        %v263 = vunpack.c.l.b16 %v225
        %v264 = vunpack.c.l.b16 %v226
        %v265 = vpack.c.b16 %v262, %v261
        %v266 = vpack.c.b16 %v264, %v263
        %v270 = vsel %vm227, %v252, 0
        %272 = vmatprep.subr.bf16.mxu0 0
        %273 = vmatpush1.bf16.msra.mxu0 %v265
        %274 = vmatprep.subr.bf16.mxu0 0
        %275 = vmatpush1.bf16.msra.mxu0 %v266
        %276 = vmatprep.subr.bf16.mxu0 0
        %277 = vmatpush1.bf16.msra.mxu0 0
        %278 = vmatprep.subr.bf16.mxu0 0
        %279 = vmatpush1.bf16.msra.mxu0 0
        %280 = vmatprep.subr.bf16.mxu0 0
        %281 = vmatpush1.bf16.msra.mxu0 0
        %282 = vmatprep.subr.bf16.mxu0 0
        %283 = vmatpush1.bf16.msra.mxu0 0
        %284 = vmatprep.subr.bf16.mxu0 0
        %285 = vmatpush1.bf16.msra.mxu0 0
        %286 = vmatprep.subr.bf16.mxu0 0
        %287 = vmatpush1.bf16.msra.mxu0 0
        %288 = vmatprep.subr.bf16.mxu0 0
        %289 = vmatpush1.bf16.msra.mxu0 0
        %290 = vmatprep.subr.bf16.mxu0 0
        %291 = vmatpush1.bf16.msra.mxu0 0
        %292 = vmatprep.subr.bf16.mxu0 0
        %293 = vmatpush1.bf16.msra.mxu0 0
        %294 = vmatprep.subr.bf16.mxu0 0
        %295 = vmatpush1.bf16.msra.mxu0 0
        %296 = vmatprep.subr.bf16.mxu0 0
        %297 = vmatpush1.bf16.msra.mxu0 0
        %298 = vmatprep.subr.bf16.mxu0 0
        %299 = vmatpush1.bf16.msra.mxu0 0
        %300 = vmatprep.subr.bf16.mxu0 0
        %301 = vmatpush1.bf16.msra.mxu0 0
        %302 = vmatprep.subr.bf16.mxu0 0
        %303 = vmatpush1.bf16.msra.mxu0 0
        %304 = vmatprep.mubr.bf16.mxu0 0
        %305 = vmatmul.mubr.bf16.gmra.mrb[0].mxu0 %v270
        %v306 = vpop.f32.mrb[0].mxu0
        %v307 = vadd.f32 %v256, %v306
        %v308 = vpop.f32.mrb[0].mxu0
        %v309 = vpop.f32.mrb[0].mxu0
        %v310 = vpop.f32.mrb[0].mxu0
        %311 = vdwg.mxu0
        %313 = vrot.lane.b32.xlu0 %v307, 96
        %v314 = vpop.permute.xlu0 %313
        %vm315 = vcmask 64512
        %v316 = vsel %vm315, %v307, 0
        %v318 = vsel %vm315, %v314, 0
        %320 = vmatprep.subr.mxu0 0.0
        %321 = vmatpush1.xpose.msra.mxu0 %v318
        %322 = vmatprep.subr.mxu0 0.0
        %323 = vmatpush1.xpose.msra.mxu0 0.0
        %324 = vmatprep.subr.mxu0 0.0
        %325 = vmatpush1.xpose.msra.mxu0 0.0
        %326 = vmatprep.subr.mxu0 0.0
        %327 = vmatpush1.xpose.msra.mxu0 0.0
        %328 = vmatprep.subr.mxu0 0.0
        %329 = vmatpush1.xpose.msra.mxu0 0.0
        %330 = vmatprep.subr.mxu0 0.0
        %331 = vmatpush1.xpose.msra.mxu0 0.0
        %332 = vmatprep.subr.mxu0 0.0
        %333 = vmatpush1.xpose.msra.mxu0 0.0
        %334 = vmatprep.subr.mxu0 0.0
        %335 = vmatpush1.xpose.msra.mxu0 0.0
        %336 = vmatprep.subr.mxu0 0.0
        %337 = vmatpush1.xpose.msra.mxu0 0.0
        %338 = vmatprep.subr.mxu0 0.0
        %339 = vmatpush1.xpose.msra.mxu0 0.0
        %340 = vmatprep.subr.mxu0 0.0
        %341 = vmatpush1.xpose.msra.mxu0 0.0
        %342 = vmatprep.subr.mxu0 0.0
        %343 = vmatpush1.xpose.msra.mxu0 0.0
        %344 = vmatprep.subr.mxu0 0.0
        %345 = vmatpush1.xpose.msra.mxu0 0.0
        %346 = vmatprep.subr.mxu0 0.0
        %347 = vmatpush1.xpose.msra.mxu0 0.0
        %348 = vmatprep.subr.mxu0 0.0
        %349 = vmatpush1.xpose.msra.mxu0 0.0
        %350 = vmatprep.subr.mxu0 0.0
        %351 = vmatpush1.xpose.msra.mxu0 0.0
        %352 = vmatprep.subr.mxu0 0.0
        %353 = vmatpush1.xpose.msra.mxu0 0.0
        %354 = vmatprep.subr.mxu0 0.0
        %355 = vmatpush1.xpose.msra.mxu0 0.0
        %356 = vmatprep.subr.mxu0 0.0
        %357 = vmatpush1.xpose.msra.mxu0 0.0
        %358 = vmatprep.subr.mxu0 0.0
        %359 = vmatpush1.xpose.msra.mxu0 0.0
        %360 = vmatprep.subr.mxu0 0.0
        %361 = vmatpush1.xpose.msra.mxu0 0.0
        %362 = vmatprep.subr.mxu0 0.0
        %363 = vmatpush1.xpose.msra.mxu0 0.0
        %364 = vmatprep.subr.mxu0 0.0
        %365 = vmatpush1.xpose.msra.mxu0 0.0
        %366 = vmatprep.subr.mxu0 0.0
        %367 = vmatpush1.xpose.msra.mxu0 0.0
        %368 = vmatprep.subr.mxu0 0.0
        %369 = vmatpush1.xpose.msra.mxu0 0.0
        %370 = vmatprep.subr.mxu0 0.0
        %371 = vmatpush1.xpose.msra.mxu0 0.0
        %372 = vmatprep.subr.mxu0 0.0
        %373 = vmatpush1.xpose.msra.mxu0 0.0
        %374 = vmatprep.subr.mxu0 0.0
        %375 = vmatpush1.xpose.msra.mxu0 0.0
        %376 = vmatprep.subr.mxu0 0.0
        %377 = vmatpush1.xpose.msra.mxu0 0.0
        %378 = vmatprep.subr.mxu0 0.0
        %379 = vmatpush1.xpose.msra.mxu0 0.0
        %380 = vmatprep.subr.mxu0 0.0
        %381 = vmatpush1.xpose.msra.mxu0 0.0
        %382 = vmatprep.subr.mxu0 0.0
        %383 = vmatpush1.xpose.msra.mxu0 0.0
        %384 = vmatprep.mubr.f32.mxu0 0.0
        %385 = vmatmul.mubr.f32.gmra.mrb[0].mxu0 %v316
        %v386 = vpop.f32.mrb[0].mxu0
        %v387 = vadd.f32 0.0, %v386
        %v388 = vpop.f32.mrb[0].mxu0
        %389 = vdwg.mxu0
        %390 = vrot.lane.b32.xlu0 %v307, 120
        %v391 = vpop.permute.xlu0 %390
        %392 = vrot.lane.b32.xlu0 %v307, 88
        %v393 = vpop.permute.xlu0 %392
        %v394 = vsel %vm315, %v391, 0
        %v396 = vsel %vm315, %v393, 0
        %398 = vmatprep.subr.mxu0 0.0
        %399 = vmatpush1.xpose.msra.mxu0 %v396
        %400 = vmatprep.subr.mxu0 0.0
        %401 = vmatpush1.xpose.msra.mxu0 0.0
        %402 = vmatprep.subr.mxu0 0.0
        %403 = vmatpush1.xpose.msra.mxu0 0.0
        %404 = vmatprep.subr.mxu0 0.0
        %405 = vmatpush1.xpose.msra.mxu0 0.0
        %406 = vmatprep.subr.mxu0 0.0
        %407 = vmatpush1.xpose.msra.mxu0 0.0
        %408 = vmatprep.subr.mxu0 0.0
        %409 = vmatpush1.xpose.msra.mxu0 0.0
        %410 = vmatprep.subr.mxu0 0.0
        %411 = vmatpush1.xpose.msra.mxu0 0.0
        %412 = vmatprep.subr.mxu0 0.0
        %413 = vmatpush1.xpose.msra.mxu0 0.0
        %414 = vmatprep.subr.mxu0 0.0
        %415 = vmatpush1.xpose.msra.mxu0 0.0
        %416 = vmatprep.subr.mxu0 0.0
        %417 = vmatpush1.xpose.msra.mxu0 0.0
        %418 = vmatprep.subr.mxu0 0.0
        %419 = vmatpush1.xpose.msra.mxu0 0.0
        %420 = vmatprep.subr.mxu0 0.0
        %421 = vmatpush1.xpose.msra.mxu0 0.0
        %422 = vmatprep.subr.mxu0 0.0
        %423 = vmatpush1.xpose.msra.mxu0 0.0
        %424 = vmatprep.subr.mxu0 0.0
        %425 = vmatpush1.xpose.msra.mxu0 0.0
        %426 = vmatprep.subr.mxu0 0.0
        %427 = vmatpush1.xpose.msra.mxu0 0.0
        %428 = vmatprep.subr.mxu0 0.0
        %429 = vmatpush1.xpose.msra.mxu0 0.0
        %430 = vmatprep.subr.mxu0 0.0
        %431 = vmatpush1.xpose.msra.mxu0 0.0
        %432 = vmatprep.subr.mxu0 0.0
        %433 = vmatpush1.xpose.msra.mxu0 0.0
        %434 = vmatprep.subr.mxu0 0.0
        %435 = vmatpush1.xpose.msra.mxu0 0.0
        %436 = vmatprep.subr.mxu0 0.0
        %437 = vmatpush1.xpose.msra.mxu0 0.0
        %438 = vmatprep.subr.mxu0 0.0
        %439 = vmatpush1.xpose.msra.mxu0 0.0
        %440 = vmatprep.subr.mxu0 0.0
        %441 = vmatpush1.xpose.msra.mxu0 0.0
        %442 = vmatprep.subr.mxu0 0.0
        %443 = vmatpush1.xpose.msra.mxu0 0.0
        %444 = vmatprep.subr.mxu0 0.0
        %445 = vmatpush1.xpose.msra.mxu0 0.0
        %446 = vmatprep.subr.mxu0 0.0
        %447 = vmatpush1.xpose.msra.mxu0 0.0
        %448 = vmatprep.subr.mxu0 0.0
        %449 = vmatpush1.xpose.msra.mxu0 0.0
        %450 = vmatprep.subr.mxu0 0.0
        %451 = vmatpush1.xpose.msra.mxu0 0.0
        %452 = vmatprep.subr.mxu0 0.0
        %453 = vmatpush1.xpose.msra.mxu0 0.0
        %454 = vmatprep.subr.mxu0 0.0
        %455 = vmatpush1.xpose.msra.mxu0 0.0
        %456 = vmatprep.subr.mxu0 0.0
        %457 = vmatpush1.xpose.msra.mxu0 0.0
        %458 = vmatprep.subr.mxu0 0.0
        %459 = vmatpush1.xpose.msra.mxu0 0.0
        %460 = vmatprep.subr.mxu0 0.0
        %461 = vmatpush1.xpose.msra.mxu0 0.0
        %462 = vmatprep.mubr.f32.mxu0 0.0
        %463 = vmatmul.mubr.f32.gmra.mrb[0].mxu0 %v394
        %v464 = vpop.f32.mrb[0].mxu0
        %v465 = vadd.f32 0.0, %v464
        %v466 = vpop.f32.mrb[0].mxu0
        %467 = vdwg.mxu0
        %468 = vrot.lane.b32.xlu0 %v307, 112
        %v469 = vpop.permute.xlu0 %468
        %470 = vrot.lane.b32.xlu0 %v307, 80
        %v471 = vpop.permute.xlu0 %470
        %v472 = vsel %vm315, %v469, 0
        %v474 = vsel %vm315, %v471, 0
        %476 = vmatprep.subr.mxu0 0.0
        %477 = vmatpush1.xpose.msra.mxu0 %v474
        %478 = vmatprep.subr.mxu0 0.0
        %479 = vmatpush1.xpose.msra.mxu0 0.0
        %480 = vmatprep.subr.mxu0 0.0
        %481 = vmatpush1.xpose.msra.mxu0 0.0
        %482 = vmatprep.subr.mxu0 0.0
        %483 = vmatpush1.xpose.msra.mxu0 0.0
        %484 = vmatprep.subr.mxu0 0.0
        %485 = vmatpush1.xpose.msra.mxu0 0.0
        %486 = vmatprep.subr.mxu0 0.0
        %487 = vmatpush1.xpose.msra.mxu0 0.0
        %488 = vmatprep.subr.mxu0 0.0
        %489 = vmatpush1.xpose.msra.mxu0 0.0
        %490 = vmatprep.subr.mxu0 0.0
        %491 = vmatpush1.xpose.msra.mxu0 0.0
        %492 = vmatprep.subr.mxu0 0.0
        %493 = vmatpush1.xpose.msra.mxu0 0.0
        %494 = vmatprep.subr.mxu0 0.0
        %495 = vmatpush1.xpose.msra.mxu0 0.0
        %496 = vmatprep.subr.mxu0 0.0
        %497 = vmatpush1.xpose.msra.mxu0 0.0
        %498 = vmatprep.subr.mxu0 0.0
        %499 = vmatpush1.xpose.msra.mxu0 0.0
        %500 = vmatprep.subr.mxu0 0.0
        %501 = vmatpush1.xpose.msra.mxu0 0.0
        %502 = vmatprep.subr.mxu0 0.0
        %503 = vmatpush1.xpose.msra.mxu0 0.0
        %504 = vmatprep.subr.mxu0 0.0
        %505 = vmatpush1.xpose.msra.mxu0 0.0
        %506 = vmatprep.subr.mxu0 0.0
        %507 = vmatpush1.xpose.msra.mxu0 0.0
        %508 = vmatprep.subr.mxu0 0.0
        %509 = vmatpush1.xpose.msra.mxu0 0.0
        %510 = vmatprep.subr.mxu0 0.0
        %511 = vmatpush1.xpose.msra.mxu0 0.0
        %512 = vmatprep.subr.mxu0 0.0
        %513 = vmatpush1.xpose.msra.mxu0 0.0
        %514 = vmatprep.subr.mxu0 0.0
        %515 = vmatpush1.xpose.msra.mxu0 0.0
        %516 = vmatprep.subr.mxu0 0.0
        %517 = vmatpush1.xpose.msra.mxu0 0.0
        %518 = vmatprep.subr.mxu0 0.0
        %519 = vmatpush1.xpose.msra.mxu0 0.0
        %520 = vmatprep.subr.mxu0 0.0
        %521 = vmatpush1.xpose.msra.mxu0 0.0
        %522 = vmatprep.subr.mxu0 0.0
        %523 = vmatpush1.xpose.msra.mxu0 0.0
        %524 = vmatprep.subr.mxu0 0.0
        %525 = vmatpush1.xpose.msra.mxu0 0.0
        %526 = vmatprep.subr.mxu0 0.0
        %527 = vmatpush1.xpose.msra.mxu0 0.0
        %528 = vmatprep.subr.mxu0 0.0
        %529 = vmatpush1.xpose.msra.mxu0 0.0
        %530 = vmatprep.subr.mxu0 0.0
        %531 = vmatpush1.xpose.msra.mxu0 0.0
        %532 = vmatprep.subr.mxu0 0.0
        %533 = vmatpush1.xpose.msra.mxu0 0.0
        %534 = vmatprep.subr.mxu0 0.0
        %535 = vmatpush1.xpose.msra.mxu0 0.0
        %536 = vmatprep.subr.mxu0 0.0
        %537 = vmatpush1.xpose.msra.mxu0 0.0
        %538 = vmatprep.subr.mxu0 0.0
        %539 = vmatpush1.xpose.msra.mxu0 0.0
        %540 = vmatprep.mubr.f32.mxu0 0.0
        %541 = vmatmul.mubr.f32.gmra.mrb[0].mxu0 %v472
        %v542 = vpop.f32.mrb[0].mxu0
        %v543 = vadd.f32 0.0, %v542
        %v544 = vpop.f32.mrb[0].mxu0
        %545 = vdwg.mxu0
        %546 = vrot.lane.b32.xlu0 %v307, 104
        %v547 = vpop.permute.xlu0 %546
        %548 = vrot.lane.b32.xlu0 %v307, 72
        %v549 = vpop.permute.xlu0 %548
        %v550 = vsel %vm315, %v547, 0
        %v552 = vsel %vm315, %v549, 0
        %554 = vmatprep.subr.mxu0 0.0
        %555 = vmatpush1.xpose.msra.mxu0 %v552
        %556 = vmatprep.subr.mxu0 0.0
        %557 = vmatpush1.xpose.msra.mxu0 0.0
        %558 = vmatprep.subr.mxu0 0.0
        %559 = vmatpush1.xpose.msra.mxu0 0.0
        %560 = vmatprep.subr.mxu0 0.0
        %561 = vmatpush1.xpose.msra.mxu0 0.0
        %562 = vmatprep.subr.mxu0 0.0
        %563 = vmatpush1.xpose.msra.mxu0 0.0
        %564 = vmatprep.subr.mxu0 0.0
        %565 = vmatpush1.xpose.msra.mxu0 0.0
        %566 = vmatprep.subr.mxu0 0.0
        %567 = vmatpush1.xpose.msra.mxu0 0.0
        %568 = vmatprep.subr.mxu0 0.0
        %569 = vmatpush1.xpose.msra.mxu0 0.0
        %570 = vmatprep.subr.mxu0 0.0
        %571 = vmatpush1.xpose.msra.mxu0 0.0
        %572 = vmatprep.subr.mxu0 0.0
        %573 = vmatpush1.xpose.msra.mxu0 0.0
        %574 = vmatprep.subr.mxu0 0.0
        %575 = vmatpush1.xpose.msra.mxu0 0.0
        %576 = vmatprep.subr.mxu0 0.0
        %577 = vmatpush1.xpose.msra.mxu0 0.0
        %578 = vmatprep.subr.mxu0 0.0
        %579 = vmatpush1.xpose.msra.mxu0 0.0
        %580 = vmatprep.subr.mxu0 0.0
        %581 = vmatpush1.xpose.msra.mxu0 0.0
        %582 = vmatprep.subr.mxu0 0.0
        %583 = vmatpush1.xpose.msra.mxu0 0.0
        %584 = vmatprep.subr.mxu0 0.0
        %585 = vmatpush1.xpose.msra.mxu0 0.0
        %586 = vmatprep.subr.mxu0 0.0
        %587 = vmatpush1.xpose.msra.mxu0 0.0
        %588 = vmatprep.subr.mxu0 0.0
        %589 = vmatpush1.xpose.msra.mxu0 0.0
        %590 = vmatprep.subr.mxu0 0.0
        %591 = vmatpush1.xpose.msra.mxu0 0.0
        %592 = vmatprep.subr.mxu0 0.0
        %593 = vmatpush1.xpose.msra.mxu0 0.0
        %594 = vmatprep.subr.mxu0 0.0
        %595 = vmatpush1.xpose.msra.mxu0 0.0
        %596 = vmatprep.subr.mxu0 0.0
        %597 = vmatpush1.xpose.msra.mxu0 0.0
        %598 = vmatprep.subr.mxu0 0.0
        %599 = vmatpush1.xpose.msra.mxu0 0.0
        %600 = vmatprep.subr.mxu0 0.0
        %601 = vmatpush1.xpose.msra.mxu0 0.0
        %602 = vmatprep.subr.mxu0 0.0
        %603 = vmatpush1.xpose.msra.mxu0 0.0
        %604 = vmatprep.subr.mxu0 0.0
        %605 = vmatpush1.xpose.msra.mxu0 0.0
        %606 = vmatprep.subr.mxu0 0.0
        %607 = vmatpush1.xpose.msra.mxu0 0.0
        %608 = vmatprep.subr.mxu0 0.0
        %609 = vmatpush1.xpose.msra.mxu0 0.0
        %610 = vmatprep.subr.mxu0 0.0
        %611 = vmatpush1.xpose.msra.mxu0 0.0
        %612 = vmatprep.subr.mxu0 0.0
        %613 = vmatpush1.xpose.msra.mxu0 0.0
        %614 = vmatprep.subr.mxu0 0.0
        %615 = vmatpush1.xpose.msra.mxu0 0.0
        %616 = vmatprep.subr.mxu0 0.0
        %617 = vmatpush1.xpose.msra.mxu0 0.0
        %618 = vmatprep.mubr.f32.mxu0 0.0
        %619 = vmatmul.mubr.f32.gmra.mrb[0].mxu0 %v550
        %v620 = vpop.f32.mrb[0].mxu0
        %v621 = vadd.f32 0.0, %v620
        %v622 = vpop.f32.mrb[0].mxu0
        %623 = vdwg.mxu0
        %v624 = vsel %vm315, %v387, -inf
        %625 = vmax.xlane.f32.xlu0 %v624
        %v626 = vpop.xlane.xlu0 %625
        %v627 = vsel %vm315, %v465, -inf
        %628 = vmax.xlane.f32.xlu0 %v627
        %v629 = vpop.xlane.xlu0 %628
        %v630 = vsel %vm315, %v543, -inf
        %631 = vmax.xlane.f32.xlu0 %v630
        %v632 = vpop.xlane.xlu0 %631
        %v633 = vsel %vm315, %v621, -inf
        %634 = vmax.xlane.f32.xlu0 %v633
        %v635 = vpop.xlane.xlu0 %634
        %v636 = vsub.f32 %v387, %v626
        %v637 = vsub.f32 %v465, %v629
        %v638 = vsub.f32 %v543, %v632
        %v639 = vsub.f32 %v621, %v635
        %v640 = vmul.f32 %v636, 1.442695
        %v641 = vpow.pop %v640
        %v642 = vmul.f32 %v637, 1.442695
        %v643 = vpow.pop %v642
        %v644 = vmul.f32 %v638, 1.442695
        %v645 = vpow.pop %v644
        %v646 = vmul.f32 %v639, 1.442695
        %v647 = vpow.pop %v646
        %v648 = vsel %vm315, %v641, 0.0
        %649 = vadd.xlane.f32.xlu0 %v648
        %v650 = vpop.xlane.xlu0 %649
        %v651 = vsel %vm315, %v643, 0.0
        %652 = vadd.xlane.f32.xlu0 %v651
        %v653 = vpop.xlane.xlu0 %652
        %v654 = vsel %vm315, %v645, 0.0
        %655 = vadd.xlane.f32.xlu0 %v654
        %v656 = vpop.xlane.xlu0 %655
        %v657 = vsel %vm315, %v647, 0.0
        %658 = vadd.xlane.f32.xlu0 %v657
        %v659 = vpop.xlane.xlu0 %658
        %v660 = vrcp.pop %v650
        %v661 = vrcp.pop %v653
        %v662 = vrcp.pop %v656
        %v663 = vrcp.pop %v659
        %v664 = vmul.f32 %v641, %v660
        %v665 = vmul.f32 %v643, %v661
        %v666 = vmul.f32 %v645, %v662
        %v667 = vmul.f32 %v647, %v663
        %v668 = vlaneseq
        %v669 = vshrl.u32 %v668, 7
        %v670 = vsub.s32 4, %v669
        %v671 = vrot.slane %v222, %v670
        %v672 = vadd.f32 %v221, %v671
        %673 = vrot.lane.b32.xlu0 %v307, 64
        %v674 = vpop.permute.xlu0 %673
        %v677 = vsel %vm315, %v664, 0
        %679 = vmatprep.subr.mxu0 0.0
        %680 = vmatpush1.msra.mxu0 %v674
        %681 = vmatprep.subr.mxu0 0.0
        %682 = vmatpush1.msra.mxu0 0.0
        %683 = vmatprep.subr.mxu0 0.0
        %684 = vmatpush1.msra.mxu0 0.0
        %685 = vmatprep.subr.mxu0 0.0
        %686 = vmatpush1.msra.mxu0 0.0
        %687 = vmatprep.subr.mxu0 0.0
        %688 = vmatpush1.msra.mxu0 0.0
        %689 = vmatprep.subr.mxu0 0.0
        %690 = vmatpush1.msra.mxu0 0.0
        %691 = vmatprep.subr.mxu0 0.0
        %692 = vmatpush1.msra.mxu0 0.0
        %693 = vmatprep.subr.mxu0 0.0
        %694 = vmatpush1.msra.mxu0 0.0
        %695 = vmatprep.subr.mxu0 0.0
        %696 = vmatpush1.msra.mxu0 0.0
        %697 = vmatprep.subr.mxu0 0.0
        %698 = vmatpush1.msra.mxu0 0.0
        %699 = vmatprep.subr.mxu0 0.0
        %700 = vmatpush1.msra.mxu0 0.0
        %701 = vmatprep.subr.mxu0 0.0
        %702 = vmatpush1.msra.mxu0 0.0
        %703 = vmatprep.subr.mxu0 0.0
        %704 = vmatpush1.msra.mxu0 0.0
        %705 = vmatprep.subr.mxu0 0.0
        %706 = vmatpush1.msra.mxu0 0.0
        %707 = vmatprep.subr.mxu0 0.0
        %708 = vmatpush1.msra.mxu0 0.0
        %709 = vmatprep.subr.mxu0 0.0
        %710 = vmatpush1.msra.mxu0 0.0
        %711 = vmatprep.subr.mxu0 0.0
        %712 = vmatpush1.msra.mxu0 0.0
        %713 = vmatprep.subr.mxu0 0.0
        %714 = vmatpush1.msra.mxu0 0.0
        %715 = vmatprep.subr.mxu0 0.0
        %716 = vmatpush1.msra.mxu0 0.0
        %717 = vmatprep.subr.mxu0 0.0
        %718 = vmatpush1.msra.mxu0 0.0
        %719 = vmatprep.subr.mxu0 0.0
        %720 = vmatpush1.msra.mxu0 0.0
        %721 = vmatprep.subr.mxu0 0.0
        %722 = vmatpush1.msra.mxu0 0.0
        %723 = vmatprep.subr.mxu0 0.0
        %724 = vmatpush1.msra.mxu0 0.0
        %725 = vmatprep.subr.mxu0 0.0
        %726 = vmatpush1.msra.mxu0 0.0
        %727 = vmatprep.subr.mxu0 0.0
        %728 = vmatpush1.msra.mxu0 0.0
        %729 = vmatprep.subr.mxu0 0.0
        %730 = vmatpush1.msra.mxu0 0.0
        %731 = vmatprep.subr.mxu0 0.0
        %732 = vmatpush1.msra.mxu0 0.0
        %733 = vmatprep.subr.mxu0 0.0
        %734 = vmatpush1.msra.mxu0 0.0
        %735 = vmatprep.subr.mxu0 0.0
        %736 = vmatpush1.msra.mxu0 0.0
        %737 = vmatprep.subr.mxu0 0.0
        %738 = vmatpush1.msra.mxu0 0.0
        %739 = vmatprep.subr.mxu0 0.0
        %740 = vmatpush1.msra.mxu0 0.0
        %741 = vmatprep.subr.mxu0 0.0
        %742 = vmatpush1.msra.mxu0 0.0
        %743 = vmatprep.mubr.f32.mxu0 0.0
        %744 = vmatmul.mubr.f32.gmra.mrb[0].mxu0 %v677
        %v745 = vpop.f32.mrb[0].mxu0
        %v746 = vadd.f32 0.0, %v745
        %v747 = vpop.f32.mrb[0].mxu0
        %748 = vdwg.mxu0
        %v749 = vpack.c.bf16 %v746, %v746
        %v750 = vpack.c.b16 %v261, %v261
        %751 = vrot.lane.b32.xlu0 %v750, 32
        %v752 = vpop.permute.xlu0 %751
        %v754 = vsel %vm315, %v749, 0
        %vm756 = vcmask 1043456
        %v758 = vsel %vm756, %v752, 0
        %760 = vmatprep.subr.bf16.mxu0 0
        %761 = vmatpush1.bf16.msra.mxu0 %v758
        %762 = vmatprep.subr.bf16.mxu0 0
        %763 = vmatpush1.bf16.msra.mxu0 0
        %764 = vmatprep.subr.bf16.mxu0 0
        %765 = vmatpush1.bf16.msra.mxu0 0
        %766 = vmatprep.subr.bf16.mxu0 0
        %767 = vmatpush1.bf16.msra.mxu0 0
        %768 = vmatprep.subr.bf16.mxu0 0
        %769 = vmatpush1.bf16.msra.mxu0 0
        %770 = vmatprep.subr.bf16.mxu0 0
        %771 = vmatpush1.bf16.msra.mxu0 0
        %772 = vmatprep.subr.bf16.mxu0 0
        %773 = vmatpush1.bf16.msra.mxu0 0
        %774 = vmatprep.subr.bf16.mxu0 0
        %775 = vmatpush1.bf16.msra.mxu0 0
        %776 = vmatprep.subr.bf16.mxu0 0
        %777 = vmatpush1.bf16.msra.mxu0 0
        %778 = vmatprep.subr.bf16.mxu0 0
        %779 = vmatpush1.bf16.msra.mxu0 0
        %780 = vmatprep.subr.bf16.mxu0 0
        %781 = vmatpush1.bf16.msra.mxu0 0
        %782 = vmatprep.subr.bf16.mxu0 0
        %783 = vmatpush1.bf16.msra.mxu0 0
        %784 = vmatprep.subr.bf16.mxu0 0
        %785 = vmatpush1.bf16.msra.mxu0 0
        %786 = vmatprep.subr.bf16.mxu0 0
        %787 = vmatpush1.bf16.msra.mxu0 0
        %788 = vmatprep.subr.bf16.mxu0 0
        %789 = vmatpush1.bf16.msra.mxu0 0
        %790 = vmatprep.subr.bf16.mxu0 0
        %791 = vmatpush1.bf16.msra.mxu0 0
        %792 = vmatprep.mubr.bf16.mxu0 0
        %793 = vmatmul.mubr.bf16.gmra.mrb[0].mxu0 %v754
        %v794 = vpop.f32.mrb[0].mxu0
        %v795 = vadd.f32 0.0, %v794
        %v796 = vpop.f32.mrb[0].mxu0
        %v797 = vpop.f32.mrb[0].mxu0
        %v798 = vpop.f32.mrb[0].mxu0
        %799 = vdwg.mxu0
        %v800 = vadd.f32 %v672, %v795
        %801 = vrot.lane.b32.xlu0 %v307, 56
        %v802 = vpop.permute.xlu0 %801
        %v805 = vsel %vm315, %v665, 0
        %807 = vmatprep.subr.mxu0 0.0
        %808 = vmatpush1.msra.mxu0 %v802
        %809 = vmatprep.subr.mxu0 0.0
        %810 = vmatpush1.msra.mxu0 0.0
        %811 = vmatprep.subr.mxu0 0.0
        %812 = vmatpush1.msra.mxu0 0.0
        %813 = vmatprep.subr.mxu0 0.0
        %814 = vmatpush1.msra.mxu0 0.0
        %815 = vmatprep.subr.mxu0 0.0
        %816 = vmatpush1.msra.mxu0 0.0
        %817 = vmatprep.subr.mxu0 0.0
        %818 = vmatpush1.msra.mxu0 0.0
        %819 = vmatprep.subr.mxu0 0.0
        %820 = vmatpush1.msra.mxu0 0.0
        %821 = vmatprep.subr.mxu0 0.0
        %822 = vmatpush1.msra.mxu0 0.0
        %823 = vmatprep.subr.mxu0 0.0
        %824 = vmatpush1.msra.mxu0 0.0
        %825 = vmatprep.subr.mxu0 0.0
        %826 = vmatpush1.msra.mxu0 0.0
        %827 = vmatprep.subr.mxu0 0.0
        %828 = vmatpush1.msra.mxu0 0.0
        %829 = vmatprep.subr.mxu0 0.0
        %830 = vmatpush1.msra.mxu0 0.0
        %831 = vmatprep.subr.mxu0 0.0
        %832 = vmatpush1.msra.mxu0 0.0
        %833 = vmatprep.subr.mxu0 0.0
        %834 = vmatpush1.msra.mxu0 0.0
        %835 = vmatprep.subr.mxu0 0.0
        %836 = vmatpush1.msra.mxu0 0.0
        %837 = vmatprep.subr.mxu0 0.0
        %838 = vmatpush1.msra.mxu0 0.0
        %839 = vmatprep.subr.mxu0 0.0
        %840 = vmatpush1.msra.mxu0 0.0
        %841 = vmatprep.subr.mxu0 0.0
        %842 = vmatpush1.msra.mxu0 0.0
        %843 = vmatprep.subr.mxu0 0.0
        %844 = vmatpush1.msra.mxu0 0.0
        %845 = vmatprep.subr.mxu0 0.0
        %846 = vmatpush1.msra.mxu0 0.0
        %847 = vmatprep.subr.mxu0 0.0
        %848 = vmatpush1.msra.mxu0 0.0
        %849 = vmatprep.subr.mxu0 0.0
        %850 = vmatpush1.msra.mxu0 0.0
        %851 = vmatprep.subr.mxu0 0.0
        %852 = vmatpush1.msra.mxu0 0.0
        %853 = vmatprep.subr.mxu0 0.0
        %854 = vmatpush1.msra.mxu0 0.0
        %855 = vmatprep.subr.mxu0 0.0
        %856 = vmatpush1.msra.mxu0 0.0
        %857 = vmatprep.subr.mxu0 0.0
        %858 = vmatpush1.msra.mxu0 0.0
        %859 = vmatprep.subr.mxu0 0.0
        %860 = vmatpush1.msra.mxu0 0.0
        %861 = vmatprep.subr.mxu0 0.0
        %862 = vmatpush1.msra.mxu0 0.0
        %863 = vmatprep.subr.mxu0 0.0
        %864 = vmatpush1.msra.mxu0 0.0
        %865 = vmatprep.subr.mxu0 0.0
        %866 = vmatpush1.msra.mxu0 0.0
        %867 = vmatprep.subr.mxu0 0.0
        %868 = vmatpush1.msra.mxu0 0.0
        %869 = vmatprep.subr.mxu0 0.0
        %870 = vmatpush1.msra.mxu0 0.0
        %871 = vmatprep.mubr.f32.mxu0 0.0
        %872 = vmatmul.mubr.f32.gmra.mrb[0].mxu0 %v805
        %v873 = vpop.f32.mrb[0].mxu0
        %v874 = vadd.f32 0.0, %v873
        %v875 = vpop.f32.mrb[0].mxu0
        %876 = vdwg.mxu0
        %v877 = vpack.c.bf16 %v874, %v874
        %v878 = vpack.c.b16 %v262, %v262
        %879 = vrot.lane.b32.xlu0 %v878, 32
        %v880 = vpop.permute.xlu0 %879
        %v882 = vsel %vm315, %v877, 0
        %v885 = vsel %vm756, %v880, 0
        %887 = vmatprep.subr.bf16.mxu0 0
        %888 = vmatpush1.bf16.msra.mxu0 %v885
        %889 = vmatprep.subr.bf16.mxu0 0
        %890 = vmatpush1.bf16.msra.mxu0 0
        %891 = vmatprep.subr.bf16.mxu0 0
        %892 = vmatpush1.bf16.msra.mxu0 0
        %893 = vmatprep.subr.bf16.mxu0 0
        %894 = vmatpush1.bf16.msra.mxu0 0
        %895 = vmatprep.subr.bf16.mxu0 0
        %896 = vmatpush1.bf16.msra.mxu0 0
        %897 = vmatprep.subr.bf16.mxu0 0
        %898 = vmatpush1.bf16.msra.mxu0 0
        %899 = vmatprep.subr.bf16.mxu0 0
        %900 = vmatpush1.bf16.msra.mxu0 0
        %901 = vmatprep.subr.bf16.mxu0 0
        %902 = vmatpush1.bf16.msra.mxu0 0
        %903 = vmatprep.subr.bf16.mxu0 0
        %904 = vmatpush1.bf16.msra.mxu0 0
        %905 = vmatprep.subr.bf16.mxu0 0
        %906 = vmatpush1.bf16.msra.mxu0 0
        %907 = vmatprep.subr.bf16.mxu0 0
        %908 = vmatpush1.bf16.msra.mxu0 0
        %909 = vmatprep.subr.bf16.mxu0 0
        %910 = vmatpush1.bf16.msra.mxu0 0
        %911 = vmatprep.subr.bf16.mxu0 0
        %912 = vmatpush1.bf16.msra.mxu0 0
        %913 = vmatprep.subr.bf16.mxu0 0
        %914 = vmatpush1.bf16.msra.mxu0 0
        %915 = vmatprep.subr.bf16.mxu0 0
        %916 = vmatpush1.bf16.msra.mxu0 0
        %917 = vmatprep.subr.bf16.mxu0 0
        %918 = vmatpush1.bf16.msra.mxu0 0
        %919 = vmatprep.mubr.bf16.mxu0 0
        %920 = vmatmul.mubr.bf16.gmra.mrb[0].mxu0 %v882
        %v921 = vpop.f32.mrb[0].mxu0
        %v922 = vadd.f32 0.0, %v921
        %v923 = vpop.f32.mrb[0].mxu0
        %v924 = vpop.f32.mrb[0].mxu0
        %v925 = vpop.f32.mrb[0].mxu0
        %926 = vdwg.mxu0
        %v927 = vadd.f32 %v800, %v922
        %928 = vrot.lane.b32.xlu0 %v307, 48
        %v929 = vpop.permute.xlu0 %928
        %v932 = vsel %vm315, %v666, 0
        %934 = vmatprep.subr.mxu0 0.0
        %935 = vmatpush1.msra.mxu0 %v929
        %936 = vmatprep.subr.mxu0 0.0
        %937 = vmatpush1.msra.mxu0 0.0
        %938 = vmatprep.subr.mxu0 0.0
        %939 = vmatpush1.msra.mxu0 0.0
        %940 = vmatprep.subr.mxu0 0.0
        %941 = vmatpush1.msra.mxu0 0.0
        %942 = vmatprep.subr.mxu0 0.0
        %943 = vmatpush1.msra.mxu0 0.0
        %944 = vmatprep.subr.mxu0 0.0
        %945 = vmatpush1.msra.mxu0 0.0
        %946 = vmatprep.subr.mxu0 0.0
        %947 = vmatpush1.msra.mxu0 0.0
        %948 = vmatprep.subr.mxu0 0.0
        %949 = vmatpush1.msra.mxu0 0.0
        %950 = vmatprep.subr.mxu0 0.0
        %951 = vmatpush1.msra.mxu0 0.0
        %952 = vmatprep.subr.mxu0 0.0
        %953 = vmatpush1.msra.mxu0 0.0
        %954 = vmatprep.subr.mxu0 0.0
        %955 = vmatpush1.msra.mxu0 0.0
        %956 = vmatprep.subr.mxu0 0.0
        %957 = vmatpush1.msra.mxu0 0.0
        %958 = vmatprep.subr.mxu0 0.0
        %959 = vmatpush1.msra.mxu0 0.0
        %960 = vmatprep.subr.mxu0 0.0
        %961 = vmatpush1.msra.mxu0 0.0
        %962 = vmatprep.subr.mxu0 0.0
        %963 = vmatpush1.msra.mxu0 0.0
        %964 = vmatprep.subr.mxu0 0.0
        %965 = vmatpush1.msra.mxu0 0.0
        %966 = vmatprep.subr.mxu0 0.0
        %967 = vmatpush1.msra.mxu0 0.0
        %968 = vmatprep.subr.mxu0 0.0
        %969 = vmatpush1.msra.mxu0 0.0
        %970 = vmatprep.subr.mxu0 0.0
        %971 = vmatpush1.msra.mxu0 0.0
        %972 = vmatprep.subr.mxu0 0.0
        %973 = vmatpush1.msra.mxu0 0.0
        %974 = vmatprep.subr.mxu0 0.0
        %975 = vmatpush1.msra.mxu0 0.0
        %976 = vmatprep.subr.mxu0 0.0
        %977 = vmatpush1.msra.mxu0 0.0
        %978 = vmatprep.subr.mxu0 0.0
        %979 = vmatpush1.msra.mxu0 0.0
        %980 = vmatprep.subr.mxu0 0.0
        %981 = vmatpush1.msra.mxu0 0.0
        %982 = vmatprep.subr.mxu0 0.0
        %983 = vmatpush1.msra.mxu0 0.0
        %984 = vmatprep.subr.mxu0 0.0
        %985 = vmatpush1.msra.mxu0 0.0
        %986 = vmatprep.subr.mxu0 0.0
        %987 = vmatpush1.msra.mxu0 0.0
        %988 = vmatprep.subr.mxu0 0.0
        %989 = vmatpush1.msra.mxu0 0.0
        %990 = vmatprep.subr.mxu0 0.0
        %991 = vmatpush1.msra.mxu0 0.0
        %992 = vmatprep.subr.mxu0 0.0
        %993 = vmatpush1.msra.mxu0 0.0
        %994 = vmatprep.subr.mxu0 0.0
        %995 = vmatpush1.msra.mxu0 0.0
        %996 = vmatprep.subr.mxu0 0.0
        %997 = vmatpush1.msra.mxu0 0.0
        %998 = vmatprep.mubr.f32.mxu0 0.0
        %999 = vmatmul.mubr.f32.gmra.mrb[0].mxu0 %v932
        %v1000 = vpop.f32.mrb[0].mxu0
        %v1001 = vadd.f32 0.0, %v1000
        %v1002 = vpop.f32.mrb[0].mxu0
        %1003 = vdwg.mxu0
        %v1004 = vpack.c.bf16 %v1001, %v1001
        %v1005 = vpack.c.b16 %v263, %v263
        %1006 = vrot.lane.b32.xlu0 %v1005, 32
        %v1007 = vpop.permute.xlu0 %1006
        %v1009 = vsel %vm315, %v1004, 0
        %v1012 = vsel %vm756, %v1007, 0
        %1014 = vmatprep.subr.bf16.mxu0 0
        %1015 = vmatpush1.bf16.msra.mxu0 %v1012
        %1016 = vmatprep.subr.bf16.mxu0 0
        %1017 = vmatpush1.bf16.msra.mxu0 0
        %1018 = vmatprep.subr.bf16.mxu0 0
        %1019 = vmatpush1.bf16.msra.mxu0 0
        %1020 = vmatprep.subr.bf16.mxu0 0
        %1021 = vmatpush1.bf16.msra.mxu0 0
        %1022 = vmatprep.subr.bf16.mxu0 0
        %1023 = vmatpush1.bf16.msra.mxu0 0
        %1024 = vmatprep.subr.bf16.mxu0 0
        %1025 = vmatpush1.bf16.msra.mxu0 0
        %1026 = vmatprep.subr.bf16.mxu0 0
        %1027 = vmatpush1.bf16.msra.mxu0 0
        %1028 = vmatprep.subr.bf16.mxu0 0
        %1029 = vmatpush1.bf16.msra.mxu0 0
        %1030 = vmatprep.subr.bf16.mxu0 0
        %1031 = vmatpush1.bf16.msra.mxu0 0
        %1032 = vmatprep.subr.bf16.mxu0 0
        %1033 = vmatpush1.bf16.msra.mxu0 0
        %1034 = vmatprep.subr.bf16.mxu0 0
        %1035 = vmatpush1.bf16.msra.mxu0 0
        %1036 = vmatprep.subr.bf16.mxu0 0
        %1037 = vmatpush1.bf16.msra.mxu0 0
        %1038 = vmatprep.subr.bf16.mxu0 0
        %1039 = vmatpush1.bf16.msra.mxu0 0
        %1040 = vmatprep.subr.bf16.mxu0 0
        %1041 = vmatpush1.bf16.msra.mxu0 0
        %1042 = vmatprep.subr.bf16.mxu0 0
        %1043 = vmatpush1.bf16.msra.mxu0 0
        %1044 = vmatprep.subr.bf16.mxu0 0
        %1045 = vmatpush1.bf16.msra.mxu0 0
        %1046 = vmatprep.mubr.bf16.mxu0 0
        %1047 = vmatmul.mubr.bf16.gmra.mrb[0].mxu0 %v1009
        %v1048 = vpop.f32.mrb[0].mxu0
        %v1049 = vadd.f32 0.0, %v1048
        %v1050 = vpop.f32.mrb[0].mxu0
        %v1051 = vpop.f32.mrb[0].mxu0
        %v1052 = vpop.f32.mrb[0].mxu0
        %1053 = vdwg.mxu0
        %v1054 = vadd.f32 %v927, %v1049
        %1055 = vrot.lane.b32.xlu0 %v307, 40
        %v1056 = vpop.permute.xlu0 %1055
        %v1059 = vsel %vm315, %v667, 0
        %1061 = vmatprep.subr.mxu0 0.0
        %1062 = vmatpush1.msra.mxu0 %v1056
        %1063 = vmatprep.subr.mxu0 0.0
        %1064 = vmatpush1.msra.mxu0 0.0
        %1065 = vmatprep.subr.mxu0 0.0
        %1066 = vmatpush1.msra.mxu0 0.0
        %1067 = vmatprep.subr.mxu0 0.0
        %1068 = vmatpush1.msra.mxu0 0.0
        %1069 = vmatprep.subr.mxu0 0.0
        %1070 = vmatpush1.msra.mxu0 0.0
        %1071 = vmatprep.subr.mxu0 0.0
        %1072 = vmatpush1.msra.mxu0 0.0
        %1073 = vmatprep.subr.mxu0 0.0
        %1074 = vmatpush1.msra.mxu0 0.0
        %1075 = vmatprep.subr.mxu0 0.0
        %1076 = vmatpush1.msra.mxu0 0.0
        %1077 = vmatprep.subr.mxu0 0.0
        %1078 = vmatpush1.msra.mxu0 0.0
        %1079 = vmatprep.subr.mxu0 0.0
        %1080 = vmatpush1.msra.mxu0 0.0
        %1081 = vmatprep.subr.mxu0 0.0
        %1082 = vmatpush1.msra.mxu0 0.0
        %1083 = vmatprep.subr.mxu0 0.0
        %1084 = vmatpush1.msra.mxu0 0.0
        %1085 = vmatprep.subr.mxu0 0.0
        %1086 = vmatpush1.msra.mxu0 0.0
        %1087 = vmatprep.subr.mxu0 0.0
        %1088 = vmatpush1.msra.mxu0 0.0
        %1089 = vmatprep.subr.mxu0 0.0
        %1090 = vmatpush1.msra.mxu0 0.0
        %1091 = vmatprep.subr.mxu0 0.0
        %1092 = vmatpush1.msra.mxu0 0.0
        %1093 = vmatprep.subr.mxu0 0.0
        %1094 = vmatpush1.msra.mxu0 0.0
        %1095 = vmatprep.subr.mxu0 0.0
        %1096 = vmatpush1.msra.mxu0 0.0
        %1097 = vmatprep.subr.mxu0 0.0
        %1098 = vmatpush1.msra.mxu0 0.0
        %1099 = vmatprep.subr.mxu0 0.0
        %1100 = vmatpush1.msra.mxu0 0.0
        %1101 = vmatprep.subr.mxu0 0.0
        %1102 = vmatpush1.msra.mxu0 0.0
        %1103 = vmatprep.subr.mxu0 0.0
        %1104 = vmatpush1.msra.mxu0 0.0
        %1105 = vmatprep.subr.mxu0 0.0
        %1106 = vmatpush1.msra.mxu0 0.0
        %1107 = vmatprep.subr.mxu0 0.0
        %1108 = vmatpush1.msra.mxu0 0.0
        %1109 = vmatprep.subr.mxu0 0.0
        %1110 = vmatpush1.msra.mxu0 0.0
        %1111 = vmatprep.subr.mxu0 0.0
        %1112 = vmatpush1.msra.mxu0 0.0
        %1113 = vmatprep.subr.mxu0 0.0
        %1114 = vmatpush1.msra.mxu0 0.0
        %1115 = vmatprep.subr.mxu0 0.0
        %1116 = vmatpush1.msra.mxu0 0.0
        %1117 = vmatprep.subr.mxu0 0.0
        %1118 = vmatpush1.msra.mxu0 0.0
        %1119 = vmatprep.subr.mxu0 0.0
        %1120 = vmatpush1.msra.mxu0 0.0
        %1121 = vmatprep.subr.mxu0 0.0
        %1122 = vmatpush1.msra.mxu0 0.0
        %1123 = vmatprep.subr.mxu0 0.0
        %1124 = vmatpush1.msra.mxu0 0.0
        %1125 = vmatprep.mubr.f32.mxu0 0.0
        %1126 = vmatmul.mubr.f32.gmra.mrb[0].mxu0 %v1059
        %v1127 = vpop.f32.mrb[0].mxu0
        %v1128 = vadd.f32 0.0, %v1127
        %v1129 = vpop.f32.mrb[0].mxu0
        %1130 = vdwg.mxu0
        %v1131 = vpack.c.bf16 %v1128, %v1128
        %v1132 = vpack.c.b16 %v264, %v264
        %1133 = vrot.lane.b32.xlu0 %v1132, 32
        %v1134 = vpop.permute.xlu0 %1133
        %v1136 = vsel %vm315, %v1131, 0
        %v1139 = vsel %vm756, %v1134, 0
        %1141 = vmatprep.subr.bf16.mxu0 0
        %1142 = vmatpush1.bf16.msra.mxu0 %v1139
        %1143 = vmatprep.subr.bf16.mxu0 0
        %1144 = vmatpush1.bf16.msra.mxu0 0
        %1145 = vmatprep.subr.bf16.mxu0 0
        %1146 = vmatpush1.bf16.msra.mxu0 0
        %1147 = vmatprep.subr.bf16.mxu0 0
        %1148 = vmatpush1.bf16.msra.mxu0 0
        %1149 = vmatprep.subr.bf16.mxu0 0
        %1150 = vmatpush1.bf16.msra.mxu0 0
        %1151 = vmatprep.subr.bf16.mxu0 0
        %1152 = vmatpush1.bf16.msra.mxu0 0
        %1153 = vmatprep.subr.bf16.mxu0 0
        %1154 = vmatpush1.bf16.msra.mxu0 0
        %1155 = vmatprep.subr.bf16.mxu0 0
        %1156 = vmatpush1.bf16.msra.mxu0 0
        %1157 = vmatprep.subr.bf16.mxu0 0
        %1158 = vmatpush1.bf16.msra.mxu0 0
        %1159 = vmatprep.subr.bf16.mxu0 0
        %1160 = vmatpush1.bf16.msra.mxu0 0
        %1161 = vmatprep.subr.bf16.mxu0 0
        %1162 = vmatpush1.bf16.msra.mxu0 0
        %1163 = vmatprep.subr.bf16.mxu0 0
        %1164 = vmatpush1.bf16.msra.mxu0 0
        %1165 = vmatprep.subr.bf16.mxu0 0
        %1166 = vmatpush1.bf16.msra.mxu0 0
        %1167 = vmatprep.subr.bf16.mxu0 0
        %1168 = vmatpush1.bf16.msra.mxu0 0
        %1169 = vmatprep.subr.bf16.mxu0 0
        %1170 = vmatpush1.bf16.msra.mxu0 0
        %1171 = vmatprep.subr.bf16.mxu0 0
        %1172 = vmatpush1.bf16.msra.mxu0 0
        %1173 = vmatprep.mubr.bf16.mxu0 0
        %1174 = vmatmul.mubr.bf16.gmra.mrb[0].mxu0 %v1136
        %v1175 = vpop.f32.mrb[0].mxu0
        %v1176 = vadd.f32 0.0, %v1175
        %v1177 = vpop.f32.mrb[0].mxu0
        %v1178 = vpop.f32.mrb[0].mxu0
        %v1179 = vpop.f32.mrb[0].mxu0
        %1180 = vdwg.mxu0
        %v1181 = vadd.f32 %v1054, %v1176
        %v1182 = vsel %vm227, %v1181, 0.0
        %1183 = vadd.xlane.f32.xlu0 %v1182
        %v1184 = vpop.xlane.xlu0 %1183
        %v1185 = vmul.f32 %v1184, %v231
        %v1186 = vsub.f32 %v1181, %v1185
        %v1187 = vmul.f32 %v1186, %v1186
        %v1188 = vsel %vm227, %v1187, 0.0
        %1189 = vadd.xlane.f32.xlu0 %v1188
        %v1190 = vpop.xlane.xlu0 %1189
        %v1191 = vmul.f32 %v1190, %v231
        %v1192 = vadd.f32 %v1191, 1e-05
        %v1193 = vrsqrt.pop %v1192
        %v1194 = vmul.f32 %v1186, %v1193
        %v1195 = vlaneseq
        %v1196 = vshrl.u32 %v1195, 7
        %v1197 = vsub.s32 2, %v1196
        %v1198 = vrot.slane %v222, %v1197
        %v1199 = vmul.f32 %v1194, %v1198
        %v1200 = vlaneseq
        %v1201 = vshrl.u32 %v1200, 7
        %v1202 = vsub.s32 3, %v1201
        %v1203 = vrot.slane %v222, %v1202
        %v1204 = vadd.f32 %v1199, %v1203
        %v1205 = vpack.c.bf16 %v1204, %v1204
        %v1206 = vld [vmem:[%s3] sm:$0xf]
        %v1207 = vld [vmem:[%s3 + $0x4] sm:$0xf]
        %v1208 = vld [vmem:[%s3 + $0x8] sm:$0xf]
        %v1209 = vld [vmem:[%s3 + $0xc] sm:$0xf]
        %v1210 = vlaneseq
        %v1211 = vshrl.u32 %v1210, 7
        %v1212 = vsub.s32 7, %v1211
        %v1213 = vrot.slane %v222, %v1212
        %v1218 = vunpack.c.l.b16 %v1206
        %v1219 = vunpack.c.l.b16 %v1207
        %v1220 = vunpack.c.l.b16 %v1208
        %v1221 = vunpack.c.l.b16 %v1209
        %v1222 = vpack.c.b16 %v1219, %v1218
        %v1223 = vpack.c.b16 %v1221, %v1220
        %v1227 = vsel %vm227, %v1205, 0
        %1229 = vmatprep.subr.bf16.mxu0 0
        %1230 = vmatpush1.bf16.msra.mxu0 %v1222
        %1231 = vmatprep.subr.bf16.mxu0 0
        %1232 = vmatpush1.bf16.msra.mxu0 %v1223
        %1233 = vmatprep.subr.bf16.mxu0 0
        %1234 = vmatpush1.bf16.msra.mxu0 0
        %1235 = vmatprep.subr.bf16.mxu0 0
        %1236 = vmatpush1.bf16.msra.mxu0 0
        %1237 = vmatprep.subr.bf16.mxu0 0
        %1238 = vmatpush1.bf16.msra.mxu0 0
        %1239 = vmatprep.subr.bf16.mxu0 0
        %1240 = vmatpush1.bf16.msra.mxu0 0
        %1241 = vmatprep.subr.bf16.mxu0 0
        %1242 = vmatpush1.bf16.msra.mxu0 0
        %1243 = vmatprep.subr.bf16.mxu0 0
        %1244 = vmatpush1.bf16.msra.mxu0 0
        %1245 = vmatprep.subr.bf16.mxu0 0
        %1246 = vmatpush1.bf16.msra.mxu0 0
        %1247 = vmatprep.subr.bf16.mxu0 0
        %1248 = vmatpush1.bf16.msra.mxu0 0
        %1249 = vmatprep.subr.bf16.mxu0 0
        %1250 = vmatpush1.bf16.msra.mxu0 0
        %1251 = vmatprep.subr.bf16.mxu0 0
        %1252 = vmatpush1.bf16.msra.mxu0 0
        %1253 = vmatprep.subr.bf16.mxu0 0
        %1254 = vmatpush1.bf16.msra.mxu0 0
        %1255 = vmatprep.subr.bf16.mxu0 0
        %1256 = vmatpush1.bf16.msra.mxu0 0
        %1257 = vmatprep.subr.bf16.mxu0 0
        %1258 = vmatpush1.bf16.msra.mxu0 0
        %1259 = vmatprep.subr.bf16.mxu0 0
        %1260 = vmatpush1.bf16.msra.mxu0 0
        %1261 = vmatprep.mubr.bf16.mxu0 0
        %1262 = vmatmul.mubr.bf16.gmra.mrb[0].mxu0 %v1227
        %v1263 = vpop.f32.mrb[0].mxu0
        %v1264 = vadd.f32 %v1213, %v1263
        %v1265 = vpop.f32.mrb[0].mxu0
        %v1266 = vpop.f32.mrb[0].mxu0
        %v1267 = vpop.f32.mrb[0].mxu0
        %1268 = vdwg.mxu0
        %v1269 = vmul.f32 %v1264, 0.5
        %v1270 = vmul.f32 %v1264, 0.044715
        %v1271 = vmul.f32 %v1270, %v1264
        %v1272 = vmul.f32 %v1271, %v1264
        %v1273 = vadd.f32 %v1264, %v1272
        %v1274 = vmul.f32 %v1273, 0.7978846
        %v1275 = vtanh.pop %v1274
        %v1276 = vadd.f32 %v1275, 1.0
        %v1277 = vmul.f32 %v1269, %v1276
        %v1278 = vpack.c.bf16 %v1277, %v1277
        %v1279 = vld [vmem:[%s4] sm:$0xf]
        %v1280 = vld [vmem:[%s4 + $0x4] sm:$0xf]
        %v1281 = vld [vmem:[%s4 + $0x8] sm:$0xf]
        %v1282 = vld [vmem:[%s4 + $0xc] sm:$0xf]
        %v1283 = vld [vmem:[%s4 + $0x10] sm:$0xf]
        %v1284 = vld [vmem:[%s4 + $0x14] sm:$0xf]
        %v1285 = vld [vmem:[%s4 + $0x18] sm:$0xf]
        %v1286 = vld [vmem:[%s4 + $0x1c] sm:$0xf]
        %v1287 = vld [vmem:[%s4 + $0x20] sm:$0xf]
        %v1288 = vld [vmem:[%s4 + $0x24] sm:$0xf]
        %v1289 = vld [vmem:[%s4 + $0x28] sm:$0xf]
        %v1290 = vld [vmem:[%s4 + $0x2c] sm:$0xf]
        %v1291 = vld [vmem:[%s4 + $0x30] sm:$0xf]
        %v1292 = vld [vmem:[%s4 + $0x34] sm:$0xf]
        %v1293 = vld [vmem:[%s4 + $0x38] sm:$0xf]
        %v1294 = vld [vmem:[%s4 + $0x3c] sm:$0xf]
        %v1295 = vlaneseq
        %v1296 = vshrl.u32 %v1295, 7
        %v1297 = vsub.s32 5, %v1296
        %v1298 = vrot.slane %v222, %v1297
        %v1315 = vunpack.c.l.b16 %v1279
        %v1316 = vunpack.c.l.b16 %v1280
        %v1317 = vunpack.c.l.b16 %v1281
        %v1318 = vunpack.c.l.b16 %v1282
        %v1319 = vunpack.c.l.b16 %v1283
        %v1320 = vunpack.c.l.b16 %v1284
        %v1321 = vunpack.c.l.b16 %v1285
        %v1322 = vunpack.c.l.b16 %v1286
        %v1323 = vunpack.c.l.b16 %v1287
        %v1324 = vunpack.c.l.b16 %v1288
        %v1325 = vunpack.c.l.b16 %v1289
        %v1326 = vunpack.c.l.b16 %v1290
        %v1327 = vunpack.c.l.b16 %v1291
        %v1328 = vunpack.c.l.b16 %v1292
        %v1329 = vunpack.c.l.b16 %v1293
        %v1330 = vunpack.c.l.b16 %v1294
        %v1331 = vpack.c.b16 %v1316, %v1315
        %v1332 = vpack.c.b16 %v1318, %v1317
        %v1333 = vpack.c.b16 %v1320, %v1319
        %v1334 = vpack.c.b16 %v1322, %v1321
        %v1335 = vpack.c.b16 %v1324, %v1323
        %v1336 = vpack.c.b16 %v1326, %v1325
        %v1337 = vpack.c.b16 %v1328, %v1327
        %v1338 = vpack.c.b16 %v1330, %v1329
        %1347 = vmatprep.subr.bf16.mxu0 0
        %1348 = vmatpush1.bf16.msra.mxu0 %v1331
        %1349 = vmatprep.subr.bf16.mxu0 0
        %1350 = vmatpush1.bf16.msra.mxu0 %v1332
        %1351 = vmatprep.subr.bf16.mxu0 0
        %1352 = vmatpush1.bf16.msra.mxu0 %v1333
        %1353 = vmatprep.subr.bf16.mxu0 0
        %1354 = vmatpush1.bf16.msra.mxu0 %v1334
        %1355 = vmatprep.subr.bf16.mxu0 0
        %1356 = vmatpush1.bf16.msra.mxu0 %v1335
        %1357 = vmatprep.subr.bf16.mxu0 0
        %1358 = vmatpush1.bf16.msra.mxu0 %v1336
        %1359 = vmatprep.subr.bf16.mxu0 0
        %1360 = vmatpush1.bf16.msra.mxu0 %v1337
        %1361 = vmatprep.subr.bf16.mxu0 0
        %1362 = vmatpush1.bf16.msra.mxu0 %v1338
        %1363 = vmatprep.subr.bf16.mxu0 0
        %1364 = vmatpush1.bf16.msra.mxu0 0
        %1365 = vmatprep.subr.bf16.mxu0 0
        %1366 = vmatpush1.bf16.msra.mxu0 0
        %1367 = vmatprep.subr.bf16.mxu0 0
        %1368 = vmatpush1.bf16.msra.mxu0 0
        %1369 = vmatprep.subr.bf16.mxu0 0
        %1370 = vmatpush1.bf16.msra.mxu0 0
        %1371 = vmatprep.subr.bf16.mxu0 0
        %1372 = vmatpush1.bf16.msra.mxu0 0
        %1373 = vmatprep.subr.bf16.mxu0 0
        %1374 = vmatpush1.bf16.msra.mxu0 0
        %1375 = vmatprep.subr.bf16.mxu0 0
        %1376 = vmatpush1.bf16.msra.mxu0 0
        %1377 = vmatprep.subr.bf16.mxu0 0
        %1378 = vmatpush1.bf16.msra.mxu0 0
        %1379 = vmatprep.mubr.bf16.mxu0 0
        %1380 = vmatmul.mubr.bf16.gmra.mrb[0].mxu0 %v1278
        %v1381 = vpop.f32.mrb[0].mxu0
        %v1382 = vadd.f32 %v1298, %v1381
        %v1383 = vpop.f32.mrb[0].mxu0
        %v1384 = vpop.f32.mrb[0].mxu0
        %v1385 = vpop.f32.mrb[0].mxu0
        %1386 = vdwg.mxu0
        %v1387 = vadd.f32 %v1181, %v1382
        %1388 = vst.msk [vmem:[%s215] sm:$0xff] %vm227, %v1387
        %s1389 = sand.u32 %s137, 1
        %s1390 = scalar_lea.sflag [#allocation3], %s1389
        %s1391 = sand.u32 %s137, 1
        %s1392 = smul.addr %s1391, 8
        %s1393 = scalar_lea.vmem [#allocation2], %s1392
        // Predicated region
        $region41: #{tpu_custom_call.1} parent=39 // pred_check
          %p1394 = pneg %p147
        $region42: #{tpu_custom_call.1} parent=39 // pred_check_branch
          %1396 = sbr.rel (%p1394) target = $region44
        $region43: #{tpu_custom_call.1} parent=39 // pred_region
          %s1398 = ssub.s32 128, 128
          %1399 = vsyncadd %s1390, %s1398
          %s1400 = smul.addr %s19, 128
          %s1401 = scalar_lea.hbm %s5, %s1400
          %s1403 = sshll.u32 %s1393, 4
          %s1404 = int_to_ptr.vmem [resolvable:$true] %s1403
          %1406 = dma.vmem_to_hbm [thread:$0]  %s1404, 128, %s1401, %s1390
        $region44: #{tpu_custom_call.1} parent=39 // pred_fallthru
          _
      $region40: #{tpu_custom_call.1} parent=5 // pred_fallthru
        _
      %p1407 = scmp.le.s32.totalorder 2, %s14
      // Predicated region
      $region45: #{tpu_custom_call.1} parent=5 // pred_check
        %p1408 = pneg %p1407
      $region46: #{tpu_custom_call.1} parent=5 // pred_check_branch
        %1410 = sbr.rel (%p1408) target = $region48
      $region47: #{tpu_custom_call.1} parent=5 // pred_region
        %s1411 = ssub.s32 %s14, 2
        // Predicated region
        $region49: #{tpu_custom_call.1} parent=47 // pred_check
          %p1412 = pneg %p153
        $region50: #{tpu_custom_call.1} parent=47 // pred_check_branch
          %1414 = sbr.rel (%p1412) target = $region52
        $region51: #{tpu_custom_call.1} parent=47 // pred_region
          %s1415 = sand.u32 %s138, 1
          %s1416 = scalar_lea.sflag [#allocation3], %s1415
          %s1417 = sand.u32 %s138, 1
          %s1418 = smul.addr %s1417, 8
          %s1419 = scalar_lea.vmem [#allocation2], %s1418
          %1420 = dma.done %s1416, 128
        $region52: #{tpu_custom_call.1} parent=47 // pred_fallthru
          _
      $region48: #{tpu_custom_call.1} parent=5 // pred_fallthru
        _
    $region6: #{tpu_custom_call.1} parent=1 // loop_footer
      %s18 = sadd.s32 1, %s14
    $region7: #{tpu_custom_call.1} parent=1 // loop_footer_branch
      %13 = sbr.rel target = $region3
    $region8: #{tpu_custom_call.1} parent=1 // loop_exit
      _
    %1421 = vsyncpa [#allocation3], 1
    %s1422 = scalar_lea.sflag [#allocation3], 1
    %1423 = vsyncpa %s1422, 1

</llo_original>
